<compile_context>
chip_gen: v6e
topology: v6e:2x2x1
jax: 0.10.0
libtpu: 0.0.40
codegen_flags: <defaults>
</compile_context>

<pallas_src>
import functools

import jax
import jax.numpy as jnp
from jax.experimental import pallas as pl
from jax.experimental.pallas import tpu as pltpu


def _se_conv1x1_kernel(gate_ref, w_ref, x_ref, o_ref):
    # gate_ref: (1, Cin)      pre-sigmoid SE gate (resident across the grid)
    # w_ref:    (tCout, Cin)  1x1-conv weight block (PyTorch layout, no transpose)
    # x_ref:    (Cin, HW)     activation (resident across the grid)
    # o_ref:    (tCout, HW)   output block
    gate = jax.nn.sigmoid(gate_ref[...])                  # EUP transcendental, (1, Cin)
    w_scaled = (w_ref[...] * gate).astype(jnp.bfloat16)   # VPU: fold gate into weights
    x_bf16 = x_ref[...].astype(jnp.bfloat16)
    o_ref[...] = jnp.dot(                                  # single bf16 MXU matmul, f32 acc
        w_scaled, x_bf16, preferred_element_type=jnp.float32
    ).astype(o_ref.dtype)


def _num_cout_blocks():
    """2 Cout blocks on dual-TensorCore chips (v7x), else 1."""
    try:
        kind = jax.devices()[0].device_kind.lower()
    except Exception:
        return 1
    return 2 if "v7" in kind else 1


@functools.partial(jax.jit, static_argnames=("cout_blocks",))
def se_gate_conv1x1(x_nchw, gate_nc11, weight_oi11, cout_blocks=1):
    """sigmoid(gate) * x followed by 1x1 conv (no bias). NCHW in, NCHW out."""
    n, cin, h, w = x_nchw.shape
    cout = weight_oi11.shape[0]
    # Gate folding into the weight assumes a single batch (the module's shapes).
    assert n == 1, "per-batch SE gate folding implemented for N == 1 only"
    assert cout % cout_blocks == 0
    tcout = cout // cout_blocks
    assert tcout % 8 == 0, "Cout block must stay sublane-aligned"

    hw = h * w
    x_chw = x_nchw.reshape(cin, hw)            # free reshape (N=1, C outermost)
    gate_row = gate_nc11.reshape(1, cin)
    w_mat = weight_oi11.reshape(cout, cin)     # no transpose needed

    cost = pl.CostEstimate(
        flops=2 * cout * cin * hw,
        transcendentals=cin,
        bytes_accessed=4 * (cin * hw + cout * cin + cout * hw + cin),
    )

    out = pl.pallas_call(
        _se_conv1x1_kernel,
        out_shape=jax.ShapeDtypeStruct((cout, hw), x_nchw.dtype),
        grid=(cout_blocks,),
        in_specs=[
            pl.BlockSpec((1, cin), lambda j: (0, 0)),       # gate: resident
            pl.BlockSpec((tcout, cin), lambda j: (j, 0)),   # weight: Cout-blocked
            pl.BlockSpec((cin, hw), lambda j: (0, 0)),      # x: resident
        ],
        out_specs=pl.BlockSpec((tcout, hw), lambda j: (j, 0)),
        compiler_params=pltpu.CompilerParams(
            dimension_semantics=("parallel",),              # v7x: shard Cout over TCs
        ),
        cost_estimate=cost,
    )(gate_row, w_mat, x_chw)

    return out.reshape(n, cout, h, w)          # free reshape back to NCHW


if __name__ == "__main__":
    key = jax.random.PRNGKey(0)
    k_x, k_g, k_w = jax.random.split(key, 3)

    # Shapes taken directly from the module's forward.
    x327 = jax.random.normal(k_x, (1, 960, 14, 14), dtype=jnp.float32)   # feature map
    x331 = jax.random.normal(k_g, (1, 960, 1, 1), dtype=jnp.float32)     # SE gate (pre-sigmoid)
    # Conv2d(960, 160, 1x1, bias=False) weight, deterministic init.
    w = jax.random.normal(k_w, (160, 960, 1, 1), dtype=jnp.float32) * 0.02

    out = se_gate_conv1x1(x327, x331, w, cout_blocks=_num_cout_blocks())
    out = jax.block_until_ready(out)
    assert out.shape == (1, 160, 14, 14)

    # f32 reference of the module's math (sigmoid-mul then 1x1 conv).
    ref_f32 = jnp.einsum(
        "nchw,oc->nohw", x327 * jax.nn.sigmoid(x331), w.reshape(160, 960)
    )
    # bf16-matched reference (kernel does bf16 products with f32 accumulation).
    gate = jax.nn.sigmoid(x331.reshape(1, 960))
    ref_bf16 = jnp.dot(
        (w.reshape(160, 960) * gate).astype(jnp.bfloat16),
        x327.reshape(960, 14 * 14).astype(jnp.bfloat16),
        preferred_element_type=jnp.float32,
    ).reshape(1, 160, 14, 14)

    assert jnp.allclose(out, ref_bf16, atol=1e-3, rtol=1e-3)   # exact-precision match
    assert jnp.allclose(out, ref_f32, atol=3e-2, rtol=3e-2)    # bf16 vs f32 rounding

    print("KERNEL_OK")
</pallas_src>

<mosaic_0001>
module attributes {stable_mosaic.version = 11 : i64} {
  func.func @_se_conv1x1_kernel(%arg0: i32, %arg1: memref<1x960xf32, #tpu.memory_space<vmem>>, %arg2: memref<160x960xf32, #tpu.memory_space<vmem>>, %arg3: memref<960x196xf32, #tpu.memory_space<vmem>>, %arg4: memref<160x196xf32, #tpu.memory_space<vmem>>) attributes {dimension_semantics = [#tpu.dimension_semantics<parallel>], iteration_bounds = array<i64: 1>, scalar_prefetch = 0 : i64, scratch_operands = 0 : i64, tpu.core_type = #tpu.core_type<tc>, window_params = [{pipeline_mode = #tpu.pipeline_mode<synchronous>, transform_indices = @transform_0, window_bounds = array<i64: 1, 960>}, {transform_indices = @transform_1, window_bounds = array<i64: 160, 960>}, {pipeline_mode = #tpu.pipeline_mode<synchronous>, transform_indices = @transform_2, window_bounds = array<i64: 960, 196>}, {transform_indices = @transform_3, window_bounds = array<i64: 160, 196>}]} {
    %c0 = arith.constant 0 : index
    %c0_0 = arith.constant 0 : index
    %0 = vector.load %arg1[%c0, %c0_0] : memref<1x960xf32, #tpu.memory_space<vmem>>, vector<1x960xf32>
    %1 = arith.negf %0 : vector<1x960xf32>
    %2 = math.exp %1 : vector<1x960xf32>
    %cst = arith.constant 1.000000e+00 : f32
    %3 = vector.broadcast %cst : f32 to vector<1x960xf32>
    %4 = arith.addf %3, %2 : vector<1x960xf32>
    %5 = arith.divf %3, %4 : vector<1x960xf32>
    %c0_1 = arith.constant 0 : index
    %c0_2 = arith.constant 0 : index
    %6 = vector.load %arg2[%c0_1, %c0_2] : memref<160x960xf32, #tpu.memory_space<vmem>>, vector<160x960xf32>
    %7 = vector.broadcast %5 : vector<1x960xf32> to vector<160x960xf32>
    %8 = arith.mulf %6, %7 : vector<160x960xf32>
    %9 = arith.truncf %8 : vector<160x960xf32> to vector<160x960xbf16>
    %c0_3 = arith.constant 0 : index
    %c0_4 = arith.constant 0 : index
    %10 = vector.load %arg3[%c0_3, %c0_4] : memref<960x196xf32, #tpu.memory_space<vmem>>, vector<960x196xf32>
    %11 = arith.truncf %10 : vector<960x196xf32> to vector<960x196xbf16>
    %cst_5 = arith.constant dense<0.000000e+00> : vector<160x196xf32>
    %12 = tpu.matmul %9, %11, %cst_5 {dimension_numbers = #tpu.dot_dimension_numbers<[1], [0], [0], [1], [0, 0, 1, 1], [], []>} : vector<160x960xbf16>, vector<960x196xbf16>, vector<160x196xf32> -> vector<160x196xf32>
    %c0_6 = arith.constant 0 : index
    %c0_7 = arith.constant 0 : index
    %13 = vector.load %arg4[%c0_6, %c0_7] : memref<160x196xf32, #tpu.memory_space<vmem>>, vector<160x196xf32>
    tpu.vector_store %arg4[%c0_6, %c0_7], %12 {strides = array<i32>} : memref<160x196xf32, #tpu.memory_space<vmem>>, vector<160x196xf32>,
    return
  }
  func.func @transform_0(%arg0: i32) -> (i32, i32) {
    %c0_i32 = arith.constant 0 : i32
    %c0_i32_0 = arith.constant 0 : i32
    %c0_i32_1 = arith.constant 0 : i32
    return %c0_i32, %c0_i32_0 : i32, i32
  }
  func.func @transform_1(%arg0: i32) -> (i32, i32) {
    %c0_i32 = arith.constant 0 : i32
    %c0_i32_0 = arith.constant 0 : i32
    return %arg0, %c0_i32 : i32, i32
  }
  func.func @transform_2(%arg0: i32) -> (i32, i32) {
    %c0_i32 = arith.constant 0 : i32
    %c0_i32_0 = arith.constant 0 : i32
    %c0_i32_1 = arith.constant 0 : i32
    return %c0_i32, %c0_i32_0 : i32, i32
  }
  func.func @transform_3(%arg0: i32) -> (i32, i32) {
    %c0_i32 = arith.constant 0 : i32
    %c0_i32_0 = arith.constant 0 : i32
    return %arg0, %c0_i32 : i32, i32
  }
}

</mosaic_0001>

<llo_original>
// kernel: se_gate_conv1x1.1
$region0: #{se_gate_conv1x1.1}
  #allocation0 [shape = 'u32[]', space=smem, size = 0x4, offset = 0x4, fixed_abs, tag = 'smem constant byte address 0x4 - core index']
  #allocation1 [shape = 'u32[144,128]{1,0:T(1,128)}', space=vmem, size = 0x12000, scoped, tag = 'internal scratch']
  %s0 = inlined_call_operand.vmem [shape: f32[1,960], index: 0, kind: input, shape index: {}]
  %s1 = inlined_call_operand.vmem [shape: f32[160,960], index: 1, kind: input, shape index: {}]
  %s2 = inlined_call_operand.vmem [shape: f32[960,196], index: 2, kind: input, shape index: {}]
  %s3 = inlined_call_operand.vmem [shape: f32[160,196], index: 3, kind: output, shape index: {}]
  %s4 = sld [smem:[#allocation0]]
  $region22: #{se_gate_conv1x1.1} parent=0
    _
  %s6 = ssub.s32 1, %s4
  %s7 = scalar_select 0, %s6, %s4
  // Predicated region
  $region2: #{se_gate_conv1x1.1} parent=0 // pred_check
    _
  $region3: #{se_gate_conv1x1.1} parent=0 // pred_check_branch
    %9 = sbr.rel (0) target = $region5
  $region4: #{se_gate_conv1x1.1} parent=0 // pred_region
    _
  $region5: #{se_gate_conv1x1.1} parent=0 // pred_fallthru
    _
  // Predicated region
  $region6: #{se_gate_conv1x1.1} parent=0 // pred_check
    _
  $region7: #{se_gate_conv1x1.1} parent=0 // pred_check_branch
    %11 = sbr.rel (0) target = $region9
  $region8: #{se_gate_conv1x1.1} parent=0 // pred_region
    _
  $region9: #{se_gate_conv1x1.1} parent=0 // pred_fallthru
    _
  // Predicated region
  $region10: #{se_gate_conv1x1.1} parent=0 // pred_check
    _
  $region11: #{se_gate_conv1x1.1} parent=0 // pred_check_branch
    %13 = sbr.rel (0) target = $region13
  $region12: #{se_gate_conv1x1.1} parent=0 // pred_region
    _
  $region13: #{se_gate_conv1x1.1} parent=0 // pred_fallthru
    _
  %v15 = vld [vmem:[%s0] sm:$0xff]
  %v16 = vxor.u32 %v15, 2147483648
  %v17 = vmul.f32 %v16, 1.442695
  %v18 = vpow.pop %v17
  %v19 = vadd.f32 %v18, 1.0
  %v20 = vrcp.pop %v19
  %v21 = vmul.f32 1.0, %v20
  %v22 = vld [vmem:[%s1] sm:$0xff]
  %v23 = vld [vmem:[%s1 + $0x8] sm:$0xff]
  %v24 = vld [vmem:[%s1 + $0x10] sm:$0xff]
  %v25 = vld [vmem:[%s1 + $0x18] sm:$0xff]
  %v26 = vld [vmem:[%s1 + $0x20] sm:$0xff]
  %v27 = vld [vmem:[%s1 + $0x28] sm:$0xff]
  %v28 = vld [vmem:[%s1 + $0x30] sm:$0xff]
  %v29 = vld [vmem:[%s1 + $0x38] sm:$0xff]
  %v30 = vld [vmem:[%s1 + $0x40] sm:$0xff]
  %v31 = vld [vmem:[%s1 + $0x48] sm:$0xff]
  %v32 = vld [vmem:[%s1 + $0x50] sm:$0xff]
  %v33 = vld [vmem:[%s1 + $0x58] sm:$0xff]
  %v34 = vld [vmem:[%s1 + $0x60] sm:$0xff]
  %v35 = vld [vmem:[%s1 + $0x68] sm:$0xff]
  %v36 = vld [vmem:[%s1 + $0x70] sm:$0xff]
  %v37 = vld [vmem:[%s1 + $0x78] sm:$0xff]
  %v38 = vld [vmem:[%s1 + $0x80] sm:$0xff]
  %v39 = vld [vmem:[%s1 + $0x88] sm:$0xff]
  %v40 = vld [vmem:[%s1 + $0x90] sm:$0xff]
  %v41 = vld [vmem:[%s1 + $0x98] sm:$0xff]
  %v42 = vld [vmem:[%s1 + $0xa0] sm:$0xff]
  %v43 = vld [vmem:[%s1 + $0xa8] sm:$0xff]
  %v44 = vld [vmem:[%s1 + $0xb0] sm:$0xff]
  %v45 = vld [vmem:[%s1 + $0xb8] sm:$0xff]
  %v46 = vld [vmem:[%s1 + $0xc0] sm:$0xff]
  %v47 = vld [vmem:[%s1 + $0xc8] sm:$0xff]
  %v48 = vld [vmem:[%s1 + $0xd0] sm:$0xff]
  %v49 = vld [vmem:[%s1 + $0xd8] sm:$0xff]
  %v50 = vld [vmem:[%s1 + $0xe0] sm:$0xff]
  %v51 = vld [vmem:[%s1 + $0xe8] sm:$0xff]
  %v52 = vld [vmem:[%s1 + $0xf0] sm:$0xff]
  %v53 = vld [vmem:[%s1 + $0xf8] sm:$0xff]
  %v54 = vld [vmem:[%s1 + $0x100] sm:$0xff]
  %v55 = vld [vmem:[%s1 + $0x108] sm:$0xff]
  %v56 = vld [vmem:[%s1 + $0x110] sm:$0xff]
  %v57 = vld [vmem:[%s1 + $0x118] sm:$0xff]
  %v58 = vld [vmem:[%s1 + $0x120] sm:$0xff]
  %v59 = vld [vmem:[%s1 + $0x128] sm:$0xff]
  %v60 = vld [vmem:[%s1 + $0x130] sm:$0xff]
  %v61 = vld [vmem:[%s1 + $0x138] sm:$0xff]
  %v62 = vld [vmem:[%s1 + $0x140] sm:$0xff]
  %v63 = vld [vmem:[%s1 + $0x148] sm:$0xff]
  %v64 = vld [vmem:[%s1 + $0x150] sm:$0xff]
  %v65 = vld [vmem:[%s1 + $0x158] sm:$0xff]
  %v66 = vld [vmem:[%s1 + $0x160] sm:$0xff]
  %v67 = vld [vmem:[%s1 + $0x168] sm:$0xff]
  %v68 = vld [vmem:[%s1 + $0x170] sm:$0xff]
  %v69 = vld [vmem:[%s1 + $0x178] sm:$0xff]
  %v70 = vld [vmem:[%s1 + $0x180] sm:$0xff]
  %v71 = vld [vmem:[%s1 + $0x188] sm:$0xff]
  %v72 = vld [vmem:[%s1 + $0x190] sm:$0xff]
  %v73 = vld [vmem:[%s1 + $0x198] sm:$0xff]
  %v74 = vld [vmem:[%s1 + $0x1a0] sm:$0xff]
  %v75 = vld [vmem:[%s1 + $0x1a8] sm:$0xff]
  %v76 = vld [vmem:[%s1 + $0x1b0] sm:$0xff]
  %v77 = vld [vmem:[%s1 + $0x1b8] sm:$0xff]
  %v78 = vld [vmem:[%s1 + $0x1c0] sm:$0xff]
  %v79 = vld [vmem:[%s1 + $0x1c8] sm:$0xff]
  %v80 = vld [vmem:[%s1 + $0x1d0] sm:$0xff]
  %v81 = vld [vmem:[%s1 + $0x1d8] sm:$0xff]
  %v82 = vld [vmem:[%s1 + $0x1e0] sm:$0xff]
  %v83 = vld [vmem:[%s1 + $0x1e8] sm:$0xff]
  %v84 = vld [vmem:[%s1 + $0x1f0] sm:$0xff]
  %v85 = vld [vmem:[%s1 + $0x1f8] sm:$0xff]
  %v86 = vld [vmem:[%s1 + $0x200] sm:$0xff]
  %v87 = vld [vmem:[%s1 + $0x208] sm:$0xff]
  %v88 = vld [vmem:[%s1 + $0x210] sm:$0xff]
  %v89 = vld [vmem:[%s1 + $0x218] sm:$0xff]
  %v90 = vld [vmem:[%s1 + $0x220] sm:$0xff]
  %v91 = vld [vmem:[%s1 + $0x228] sm:$0xff]
  %v92 = vld [vmem:[%s1 + $0x230] sm:$0xff]
  %v93 = vld [vmem:[%s1 + $0x238] sm:$0xff]
  %v94 = vld [vmem:[%s1 + $0x240] sm:$0xff]
  %v95 = vld [vmem:[%s1 + $0x248] sm:$0xff]
  %v96 = vld [vmem:[%s1 + $0x250] sm:$0xff]
  %v97 = vld [vmem:[%s1 + $0x258] sm:$0xff]
  %v98 = vld [vmem:[%s1 + $0x260] sm:$0xff]
  %v99 = vld [vmem:[%s1 + $0x268] sm:$0xff]
  %v100 = vld [vmem:[%s1 + $0x270] sm:$0xff]
  %v101 = vld [vmem:[%s1 + $0x278] sm:$0xff]
  %v102 = vld [vmem:[%s1 + $0x280] sm:$0xff]
  %v103 = vld [vmem:[%s1 + $0x288] sm:$0xff]
  %v104 = vld [vmem:[%s1 + $0x290] sm:$0xff]
  %v105 = vld [vmem:[%s1 + $0x298] sm:$0xff]
  %v106 = vld [vmem:[%s1 + $0x2a0] sm:$0xff]
  %v107 = vld [vmem:[%s1 + $0x2a8] sm:$0xff]
  %v108 = vld [vmem:[%s1 + $0x2b0] sm:$0xff]
  %v109 = vld [vmem:[%s1 + $0x2b8] sm:$0xff]
  %v110 = vld [vmem:[%s1 + $0x2c0] sm:$0xff]
  %v111 = vld [vmem:[%s1 + $0x2c8] sm:$0xff]
  %v112 = vld [vmem:[%s1 + $0x2d0] sm:$0xff]
  %v113 = vld [vmem:[%s1 + $0x2d8] sm:$0xff]
  %v114 = vld [vmem:[%s1 + $0x2e0] sm:$0xff]
  %v115 = vld [vmem:[%s1 + $0x2e8] sm:$0xff]
  %v116 = vld [vmem:[%s1 + $0x2f0] sm:$0xff]
  %v117 = vld [vmem:[%s1 + $0x2f8] sm:$0xff]
  %v118 = vld [vmem:[%s1 + $0x300] sm:$0xff]
  %v119 = vld [vmem:[%s1 + $0x308] sm:$0xff]
  %v120 = vld [vmem:[%s1 + $0x310] sm:$0xff]
  %v121 = vld [vmem:[%s1 + $0x318] sm:$0xff]
  %v122 = vld [vmem:[%s1 + $0x320] sm:$0xff]
  %v123 = vld [vmem:[%s1 + $0x328] sm:$0xff]
  %v124 = vld [vmem:[%s1 + $0x330] sm:$0xff]
  %v125 = vld [vmem:[%s1 + $0x338] sm:$0xff]
  %v126 = vld [vmem:[%s1 + $0x340] sm:$0xff]
  %v127 = vld [vmem:[%s1 + $0x348] sm:$0xff]
  %v128 = vld [vmem:[%s1 + $0x350] sm:$0xff]
  %v129 = vld [vmem:[%s1 + $0x358] sm:$0xff]
  %v130 = vld [vmem:[%s1 + $0x360] sm:$0xff]
  %v131 = vld [vmem:[%s1 + $0x368] sm:$0xff]
  %v132 = vld [vmem:[%s1 + $0x370] sm:$0xff]
  %v133 = vld [vmem:[%s1 + $0x378] sm:$0xff]
  %v134 = vld [vmem:[%s1 + $0x380] sm:$0xff]
  %v135 = vld [vmem:[%s1 + $0x388] sm:$0xff]
  %v136 = vld [vmem:[%s1 + $0x390] sm:$0xff]
  %v137 = vld [vmem:[%s1 + $0x398] sm:$0xff]
  %v138 = vld [vmem:[%s1 + $0x3a0] sm:$0xff]
  %v139 = vld [vmem:[%s1 + $0x3a8] sm:$0xff]
  %v140 = vld [vmem:[%s1 + $0x3b0] sm:$0xff]
  %v141 = vld [vmem:[%s1 + $0x3b8] sm:$0xff]
  %v142 = vld [vmem:[%s1 + $0x3c0] sm:$0xff]
  %v143 = vld [vmem:[%s1 + $0x3c8] sm:$0xff]
  %v144 = vld [vmem:[%s1 + $0x3d0] sm:$0xff]
  %v145 = vld [vmem:[%s1 + $0x3d8] sm:$0xff]
  %v146 = vld [vmem:[%s1 + $0x3e0] sm:$0xff]
  %v147 = vld [vmem:[%s1 + $0x3e8] sm:$0xff]
  %v148 = vld [vmem:[%s1 + $0x3f0] sm:$0xff]
  %v149 = vld [vmem:[%s1 + $0x3f8] sm:$0xff]
  %v150 = vld [vmem:[%s1 + $0x400] sm:$0xff]
  %v151 = vld [vmem:[%s1 + $0x408] sm:$0xff]
  %v152 = vld [vmem:[%s1 + $0x410] sm:$0xff]
  %v153 = vld [vmem:[%s1 + $0x418] sm:$0xff]
  %v154 = vld [vmem:[%s1 + $0x420] sm:$0xff]
  %v155 = vld [vmem:[%s1 + $0x428] sm:$0xff]
  %v156 = vld [vmem:[%s1 + $0x430] sm:$0xff]
  %v157 = vld [vmem:[%s1 + $0x438] sm:$0xff]
  %v158 = vld [vmem:[%s1 + $0x440] sm:$0xff]
  %v159 = vld [vmem:[%s1 + $0x448] sm:$0xff]
  %v160 = vld [vmem:[%s1 + $0x450] sm:$0xff]
  %v161 = vld [vmem:[%s1 + $0x458] sm:$0xff]
  %v162 = vld [vmem:[%s1 + $0x460] sm:$0xff]
  %v163 = vld [vmem:[%s1 + $0x468] sm:$0xff]
  %v164 = vld [vmem:[%s1 + $0x470] sm:$0xff]
  %v165 = vld [vmem:[%s1 + $0x478] sm:$0xff]
  %v166 = vld [vmem:[%s1 + $0x480] sm:$0xff]
  %v167 = vld [vmem:[%s1 + $0x488] sm:$0xff]
  %v168 = vld [vmem:[%s1 + $0x490] sm:$0xff]
  %v169 = vld [vmem:[%s1 + $0x498] sm:$0xff]
  %v170 = vld [vmem:[%s1 + $0x4a0] sm:$0xff]
  %v171 = vld [vmem:[%s1 + $0x4a8] sm:$0xff]
  %v172 = vld [vmem:[%s1 + $0x4b0] sm:$0xff]
  %v173 = vld [vmem:[%s1 + $0x4b8] sm:$0xff]
  %v174 = vld [vmem:[%s1 + $0x4c0] sm:$0xff]
  %v175 = vld [vmem:[%s1 + $0x4c8] sm:$0xff]
  %v176 = vld [vmem:[%s1 + $0x4d0] sm:$0xff]
  %v177 = vld [vmem:[%s1 + $0x4d8] sm:$0xff]
  %v178 = vld [vmem:[%s1 + $0x4e0] sm:$0xff]
  %v179 = vld [vmem:[%s1 + $0x4e8] sm:$0xff]
  %v180 = vld [vmem:[%s1 + $0x4f0] sm:$0xff]
  %v181 = vld [vmem:[%s1 + $0x4f8] sm:$0xff]
  %v183 = vlaneseq
  %v184 = vshrl.u32 %v183, 7
  %v185 = vsub.s32 0, %v184
  %v186 = vrot.slane %v21, %v185
  %v187 = vlaneseq
  %v188 = vshrl.u32 %v187, 7
  %v189 = vsub.s32 1, %v188
  %v190 = vrot.slane %v21, %v189
  %v191 = vlaneseq
  %v192 = vshrl.u32 %v191, 7
  %v193 = vsub.s32 2, %v192
  %v194 = vrot.slane %v21, %v193
  %v195 = vlaneseq
  %v196 = vshrl.u32 %v195, 7
  %v197 = vsub.s32 3, %v196
  %v198 = vrot.slane %v21, %v197
  %v199 = vlaneseq
  %v200 = vshrl.u32 %v199, 7
  %v201 = vsub.s32 4, %v200
  %v202 = vrot.slane %v21, %v201
  %v203 = vlaneseq
  %v204 = vshrl.u32 %v203, 7
  %v205 = vsub.s32 5, %v204
  %v206 = vrot.slane %v21, %v205
  %v207 = vlaneseq
  %v208 = vshrl.u32 %v207, 7
  %v209 = vsub.s32 6, %v208
  %v210 = vrot.slane %v21, %v209
  %v211 = vlaneseq
  %v212 = vshrl.u32 %v211, 7
  %v213 = vsub.s32 7, %v212
  %v214 = vrot.slane %v21, %v213
  %v223 = vmul.f32 %v22, %v186
  %v224 = vmul.f32 %v23, %v190
  %v225 = vmul.f32 %v24, %v194
  %v226 = vmul.f32 %v25, %v198
  %v227 = vmul.f32 %v26, %v202
  %v228 = vmul.f32 %v27, %v206
  %v229 = vmul.f32 %v28, %v210
  %v230 = vmul.f32 %v29, %v214
  %v231 = vmul.f32 %v30, %v186
  %v232 = vmul.f32 %v31, %v190
  %v233 = vmul.f32 %v32, %v194
  %v234 = vmul.f32 %v33, %v198
  %v235 = vmul.f32 %v34, %v202
  %v236 = vmul.f32 %v35, %v206
  %v237 = vmul.f32 %v36, %v210
  %v238 = vmul.f32 %v37, %v214
  %v239 = vmul.f32 %v38, %v186
  %v240 = vmul.f32 %v39, %v190
  %v241 = vmul.f32 %v40, %v194
  %v242 = vmul.f32 %v41, %v198
  %v243 = vmul.f32 %v42, %v202
  %v244 = vmul.f32 %v43, %v206
  %v245 = vmul.f32 %v44, %v210
  %v246 = vmul.f32 %v45, %v214
  %v247 = vmul.f32 %v46, %v186
  %v248 = vmul.f32 %v47, %v190
  %v249 = vmul.f32 %v48, %v194
  %v250 = vmul.f32 %v49, %v198
  %v251 = vmul.f32 %v50, %v202
  %v252 = vmul.f32 %v51, %v206
  %v253 = vmul.f32 %v52, %v210
  %v254 = vmul.f32 %v53, %v214
  %v255 = vmul.f32 %v54, %v186
  %v256 = vmul.f32 %v55, %v190
  %v257 = vmul.f32 %v56, %v194
  %v258 = vmul.f32 %v57, %v198
  %v259 = vmul.f32 %v58, %v202
  %v260 = vmul.f32 %v59, %v206
  %v261 = vmul.f32 %v60, %v210
  %v262 = vmul.f32 %v61, %v214
  %v263 = vmul.f32 %v62, %v186
  %v264 = vmul.f32 %v63, %v190
  %v265 = vmul.f32 %v64, %v194
  %v266 = vmul.f32 %v65, %v198
  %v267 = vmul.f32 %v66, %v202
  %v268 = vmul.f32 %v67, %v206
  %v269 = vmul.f32 %v68, %v210
  %v270 = vmul.f32 %v69, %v214
  %v271 = vmul.f32 %v70, %v186
  %v272 = vmul.f32 %v71, %v190
  %v273 = vmul.f32 %v72, %v194
  %v274 = vmul.f32 %v73, %v198
  %v275 = vmul.f32 %v74, %v202
  %v276 = vmul.f32 %v75, %v206
  %v277 = vmul.f32 %v76, %v210
  %v278 = vmul.f32 %v77, %v214
  %v279 = vmul.f32 %v78, %v186
  %v280 = vmul.f32 %v79, %v190
  %v281 = vmul.f32 %v80, %v194
  %v282 = vmul.f32 %v81, %v198
  %v283 = vmul.f32 %v82, %v202
  %v284 = vmul.f32 %v83, %v206
  %v285 = vmul.f32 %v84, %v210
  %v286 = vmul.f32 %v85, %v214
  %v287 = vmul.f32 %v86, %v186
  %v288 = vmul.f32 %v87, %v190
  %v289 = vmul.f32 %v88, %v194
  %v290 = vmul.f32 %v89, %v198
  %v291 = vmul.f32 %v90, %v202
  %v292 = vmul.f32 %v91, %v206
  %v293 = vmul.f32 %v92, %v210
  %v294 = vmul.f32 %v93, %v214
  %v295 = vmul.f32 %v94, %v186
  %v296 = vmul.f32 %v95, %v190
  %v297 = vmul.f32 %v96, %v194
  %v298 = vmul.f32 %v97, %v198
  %v299 = vmul.f32 %v98, %v202
  %v300 = vmul.f32 %v99, %v206
  %v301 = vmul.f32 %v100, %v210
  %v302 = vmul.f32 %v101, %v214
  %v303 = vmul.f32 %v102, %v186
  %v304 = vmul.f32 %v103, %v190
  %v305 = vmul.f32 %v104, %v194
  %v306 = vmul.f32 %v105, %v198
  %v307 = vmul.f32 %v106, %v202
  %v308 = vmul.f32 %v107, %v206
  %v309 = vmul.f32 %v108, %v210
  %v310 = vmul.f32 %v109, %v214
  %v311 = vmul.f32 %v110, %v186
  %v312 = vmul.f32 %v111, %v190
  %v313 = vmul.f32 %v112, %v194
  %v314 = vmul.f32 %v113, %v198
  %v315 = vmul.f32 %v114, %v202
  %v316 = vmul.f32 %v115, %v206
  %v317 = vmul.f32 %v116, %v210
  %v318 = vmul.f32 %v117, %v214
  %v319 = vmul.f32 %v118, %v186
  %v320 = vmul.f32 %v119, %v190
  %v321 = vmul.f32 %v120, %v194
  %v322 = vmul.f32 %v121, %v198
  %v323 = vmul.f32 %v122, %v202
  %v324 = vmul.f32 %v123, %v206
  %v325 = vmul.f32 %v124, %v210
  %v326 = vmul.f32 %v125, %v214
  %v327 = vmul.f32 %v126, %v186
  %v328 = vmul.f32 %v127, %v190
  %v329 = vmul.f32 %v128, %v194
  %v330 = vmul.f32 %v129, %v198
  %v331 = vmul.f32 %v130, %v202
  %v332 = vmul.f32 %v131, %v206
  %v333 = vmul.f32 %v132, %v210
  %v334 = vmul.f32 %v133, %v214
  %v335 = vmul.f32 %v134, %v186
  %v336 = vmul.f32 %v135, %v190
  %v337 = vmul.f32 %v136, %v194
  %v338 = vmul.f32 %v137, %v198
  %v339 = vmul.f32 %v138, %v202
  %v340 = vmul.f32 %v139, %v206
  %v341 = vmul.f32 %v140, %v210
  %v342 = vmul.f32 %v141, %v214
  %v343 = vmul.f32 %v142, %v186
  %v344 = vmul.f32 %v143, %v190
  %v345 = vmul.f32 %v144, %v194
  %v346 = vmul.f32 %v145, %v198
  %v347 = vmul.f32 %v146, %v202
  %v348 = vmul.f32 %v147, %v206
  %v349 = vmul.f32 %v148, %v210
  %v350 = vmul.f32 %v149, %v214
  %v351 = vmul.f32 %v150, %v186
  %v352 = vmul.f32 %v151, %v190
  %v353 = vmul.f32 %v152, %v194
  %v354 = vmul.f32 %v153, %v198
  %v355 = vmul.f32 %v154, %v202
  %v356 = vmul.f32 %v155, %v206
  %v357 = vmul.f32 %v156, %v210
  %v358 = vmul.f32 %v157, %v214
  %v359 = vmul.f32 %v158, %v186
  %v360 = vmul.f32 %v159, %v190
  %v361 = vmul.f32 %v160, %v194
  %v362 = vmul.f32 %v161, %v198
  %v363 = vmul.f32 %v162, %v202
  %v364 = vmul.f32 %v163, %v206
  %v365 = vmul.f32 %v164, %v210
  %v366 = vmul.f32 %v165, %v214
  %v367 = vmul.f32 %v166, %v186
  %v368 = vmul.f32 %v167, %v190
  %v369 = vmul.f32 %v168, %v194
  %v370 = vmul.f32 %v169, %v198
  %v371 = vmul.f32 %v170, %v202
  %v372 = vmul.f32 %v171, %v206
  %v373 = vmul.f32 %v172, %v210
  %v374 = vmul.f32 %v173, %v214
  %v375 = vmul.f32 %v174, %v186
  %v376 = vmul.f32 %v175, %v190
  %v377 = vmul.f32 %v176, %v194
  %v378 = vmul.f32 %v177, %v198
  %v379 = vmul.f32 %v178, %v202
  %v380 = vmul.f32 %v179, %v206
  %v381 = vmul.f32 %v180, %v210
  %v382 = vmul.f32 %v181, %v214
  %v383 = vpack.c.bf16 %v231, %v223
  %v384 = vpack.c.bf16 %v232, %v224
  %v385 = vpack.c.bf16 %v233, %v225
  %v386 = vpack.c.bf16 %v234, %v226
  %v387 = vpack.c.bf16 %v235, %v227
  %v388 = vpack.c.bf16 %v236, %v228
  %v389 = vpack.c.bf16 %v237, %v229
  %v390 = vpack.c.bf16 %v238, %v230
  %v391 = vpack.c.bf16 %v247, %v239
  %v392 = vpack.c.bf16 %v248, %v240
  %v393 = vpack.c.bf16 %v249, %v241
  %v394 = vpack.c.bf16 %v250, %v242
  %v395 = vpack.c.bf16 %v251, %v243
  %v396 = vpack.c.bf16 %v252, %v244
  %v397 = vpack.c.bf16 %v253, %v245
  %v398 = vpack.c.bf16 %v254, %v246
  %v399 = vpack.c.bf16 %v263, %v255
  %v400 = vpack.c.bf16 %v264, %v256
  %v401 = vpack.c.bf16 %v265, %v257
  %v402 = vpack.c.bf16 %v266, %v258
  %v403 = vpack.c.bf16 %v267, %v259
  %v404 = vpack.c.bf16 %v268, %v260
  %v405 = vpack.c.bf16 %v269, %v261
  %v406 = vpack.c.bf16 %v270, %v262
  %v407 = vpack.c.bf16 %v279, %v271
  %v408 = vpack.c.bf16 %v280, %v272
  %v409 = vpack.c.bf16 %v281, %v273
  %v410 = vpack.c.bf16 %v282, %v274
  %v411 = vpack.c.bf16 %v283, %v275
  %v412 = vpack.c.bf16 %v284, %v276
  %v413 = vpack.c.bf16 %v285, %v277
  %v414 = vpack.c.bf16 %v286, %v278
  %v415 = vpack.c.bf16 %v295, %v287
  %v416 = vpack.c.bf16 %v296, %v288
  %v417 = vpack.c.bf16 %v297, %v289
  %v418 = vpack.c.bf16 %v298, %v290
  %v419 = vpack.c.bf16 %v299, %v291
  %v420 = vpack.c.bf16 %v300, %v292
  %v421 = vpack.c.bf16 %v301, %v293
  %v422 = vpack.c.bf16 %v302, %v294
  %v423 = vpack.c.bf16 %v311, %v303
  %v424 = vpack.c.bf16 %v312, %v304
  %v425 = vpack.c.bf16 %v313, %v305
  %v426 = vpack.c.bf16 %v314, %v306
  %v427 = vpack.c.bf16 %v315, %v307
  %v428 = vpack.c.bf16 %v316, %v308
  %v429 = vpack.c.bf16 %v317, %v309
  %v430 = vpack.c.bf16 %v318, %v310
  %v431 = vpack.c.bf16 %v327, %v319
  %v432 = vpack.c.bf16 %v328, %v320
  %v433 = vpack.c.bf16 %v329, %v321
  %v434 = vpack.c.bf16 %v330, %v322
  %v435 = vpack.c.bf16 %v331, %v323
  %v436 = vpack.c.bf16 %v332, %v324
  %v437 = vpack.c.bf16 %v333, %v325
  %v438 = vpack.c.bf16 %v334, %v326
  %v439 = vpack.c.bf16 %v343, %v335
  %v440 = vpack.c.bf16 %v344, %v336
  %v441 = vpack.c.bf16 %v345, %v337
  %v442 = vpack.c.bf16 %v346, %v338
  %v443 = vpack.c.bf16 %v347, %v339
  %v444 = vpack.c.bf16 %v348, %v340
  %v445 = vpack.c.bf16 %v349, %v341
  %v446 = vpack.c.bf16 %v350, %v342
  %v447 = vpack.c.bf16 %v359, %v351
  %v448 = vpack.c.bf16 %v360, %v352
  %v449 = vpack.c.bf16 %v361, %v353
  %v450 = vpack.c.bf16 %v362, %v354
  %v451 = vpack.c.bf16 %v363, %v355
  %v452 = vpack.c.bf16 %v364, %v356
  %v453 = vpack.c.bf16 %v365, %v357
  %v454 = vpack.c.bf16 %v366, %v358
  %v455 = vpack.c.bf16 %v375, %v367
  %v456 = vpack.c.bf16 %v376, %v368
  %v457 = vpack.c.bf16 %v377, %v369
  %v458 = vpack.c.bf16 %v378, %v370
  %v459 = vpack.c.bf16 %v379, %v371
  %v460 = vpack.c.bf16 %v380, %v372
  %v461 = vpack.c.bf16 %v381, %v373
  %v462 = vpack.c.bf16 %v382, %v374
  %v463 = vld [vmem:[%s2] sm:$0xff]
  %v464 = vld [vmem:[%s2 + $0x8] sm:$0xff]
  %v465 = vld [vmem:[%s2 + $0x10] sm:$0xff]
  %v466 = vld [vmem:[%s2 + $0x18] sm:$0xff]
  %v467 = vld [vmem:[%s2 + $0x20] sm:$0xff]
  %v468 = vld [vmem:[%s2 + $0x28] sm:$0xff]
  %v469 = vld [vmem:[%s2 + $0x30] sm:$0xff]
  %v470 = vld [vmem:[%s2 + $0x38] sm:$0xff]
  %v471 = vld [vmem:[%s2 + $0x40] sm:$0xff]
  %v472 = vld [vmem:[%s2 + $0x48] sm:$0xff]
  %v473 = vld [vmem:[%s2 + $0x50] sm:$0xff]
  %v474 = vld [vmem:[%s2 + $0x58] sm:$0xff]
  %v475 = vld [vmem:[%s2 + $0x60] sm:$0xff]
  %v476 = vld [vmem:[%s2 + $0x68] sm:$0xff]
  %v477 = vld [vmem:[%s2 + $0x70] sm:$0xff]
  %v478 = vld [vmem:[%s2 + $0x78] sm:$0xff]
  %v479 = vld [vmem:[%s2 + $0x80] sm:$0xff]
  %v480 = vld [vmem:[%s2 + $0x88] sm:$0xff]
  %v481 = vld [vmem:[%s2 + $0x90] sm:$0xff]
  %v482 = vld [vmem:[%s2 + $0x98] sm:$0xff]
  %v483 = vld [vmem:[%s2 + $0xa0] sm:$0xff]
  %v484 = vld [vmem:[%s2 + $0xa8] sm:$0xff]
  %v485 = vld [vmem:[%s2 + $0xb0] sm:$0xff]
  %v486 = vld [vmem:[%s2 + $0xb8] sm:$0xff]
  %v487 = vld [vmem:[%s2 + $0xc0] sm:$0xff]
  %v488 = vld [vmem:[%s2 + $0xc8] sm:$0xff]
  %v489 = vld [vmem:[%s2 + $0xd0] sm:$0xff]
  %v490 = vld [vmem:[%s2 + $0xd8] sm:$0xff]
  %v491 = vld [vmem:[%s2 + $0xe0] sm:$0xff]
  %v492 = vld [vmem:[%s2 + $0xe8] sm:$0xff]
  %v493 = vld [vmem:[%s2 + $0xf0] sm:$0xff]
  %v494 = vld [vmem:[%s2 + $0xf8] sm:$0xff]
  %v495 = vld [vmem:[%s2 + $0x100] sm:$0xff]
  %v496 = vld [vmem:[%s2 + $0x108] sm:$0xff]
  %v497 = vld [vmem:[%s2 + $0x110] sm:$0xff]
  %v498 = vld [vmem:[%s2 + $0x118] sm:$0xff]
  %v499 = vld [vmem:[%s2 + $0x120] sm:$0xff]
  %v500 = vld [vmem:[%s2 + $0x128] sm:$0xff]
  %v501 = vld [vmem:[%s2 + $0x130] sm:$0xff]
  %v502 = vld [vmem:[%s2 + $0x138] sm:$0xff]
  %v503 = vld [vmem:[%s2 + $0x140] sm:$0xff]
  %v504 = vld [vmem:[%s2 + $0x148] sm:$0xff]
  %v505 = vld [vmem:[%s2 + $0x150] sm:$0xff]
  %v506 = vld [vmem:[%s2 + $0x158] sm:$0xff]
  %v507 = vld [vmem:[%s2 + $0x160] sm:$0xff]
  %v508 = vld [vmem:[%s2 + $0x168] sm:$0xff]
  %v509 = vld [vmem:[%s2 + $0x170] sm:$0xff]
  %v510 = vld [vmem:[%s2 + $0x178] sm:$0xff]
  %v511 = vld [vmem:[%s2 + $0x180] sm:$0xff]
  %v512 = vld [vmem:[%s2 + $0x188] sm:$0xff]
  %v513 = vld [vmem:[%s2 + $0x190] sm:$0xff]
  %v514 = vld [vmem:[%s2 + $0x198] sm:$0xff]
  %v515 = vld [vmem:[%s2 + $0x1a0] sm:$0xff]
  %v516 = vld [vmem:[%s2 + $0x1a8] sm:$0xff]
  %v517 = vld [vmem:[%s2 + $0x1b0] sm:$0xff]
  %v518 = vld [vmem:[%s2 + $0x1b8] sm:$0xff]
  %v519 = vld [vmem:[%s2 + $0x1c0] sm:$0xff]
  %v520 = vld [vmem:[%s2 + $0x1c8] sm:$0xff]
  %v521 = vld [vmem:[%s2 + $0x1d0] sm:$0xff]
  %v522 = vld [vmem:[%s2 + $0x1d8] sm:$0xff]
  %v523 = vld [vmem:[%s2 + $0x1e0] sm:$0xff]
  %v524 = vld [vmem:[%s2 + $0x1e8] sm:$0xff]
  %v525 = vld [vmem:[%s2 + $0x1f0] sm:$0xff]
  %v526 = vld [vmem:[%s2 + $0x1f8] sm:$0xff]
  %v527 = vld [vmem:[%s2 + $0x200] sm:$0xff]
  %v528 = vld [vmem:[%s2 + $0x208] sm:$0xff]
  %v529 = vld [vmem:[%s2 + $0x210] sm:$0xff]
  %v530 = vld [vmem:[%s2 + $0x218] sm:$0xff]
  %v531 = vld [vmem:[%s2 + $0x220] sm:$0xff]
  %v532 = vld [vmem:[%s2 + $0x228] sm:$0xff]
  %v533 = vld [vmem:[%s2 + $0x230] sm:$0xff]
  %v534 = vld [vmem:[%s2 + $0x238] sm:$0xff]
  %v535 = vld [vmem:[%s2 + $0x240] sm:$0xff]
  %v536 = vld [vmem:[%s2 + $0x248] sm:$0xff]
  %v537 = vld [vmem:[%s2 + $0x250] sm:$0xff]
  %v538 = vld [vmem:[%s2 + $0x258] sm:$0xff]
  %v539 = vld [vmem:[%s2 + $0x260] sm:$0xff]
  %v540 = vld [vmem:[%s2 + $0x268] sm:$0xff]
  %v541 = vld [vmem:[%s2 + $0x270] sm:$0xff]
  %v542 = vld [vmem:[%s2 + $0x278] sm:$0xff]
  %v543 = vld [vmem:[%s2 + $0x280] sm:$0xff]
  %v544 = vld [vmem:[%s2 + $0x288] sm:$0xff]
  %v545 = vld [vmem:[%s2 + $0x290] sm:$0xff]
  %v546 = vld [vmem:[%s2 + $0x298] sm:$0xff]
  %v547 = vld [vmem:[%s2 + $0x2a0] sm:$0xff]
  %v548 = vld [vmem:[%s2 + $0x2a8] sm:$0xff]
  %v549 = vld [vmem:[%s2 + $0x2b0] sm:$0xff]
  %v550 = vld [vmem:[%s2 + $0x2b8] sm:$0xff]
  %v551 = vld [vmem:[%s2 + $0x2c0] sm:$0xff]
  %v552 = vld [vmem:[%s2 + $0x2c8] sm:$0xff]
  %v553 = vld [vmem:[%s2 + $0x2d0] sm:$0xff]
  %v554 = vld [vmem:[%s2 + $0x2d8] sm:$0xff]
  %v555 = vld [vmem:[%s2 + $0x2e0] sm:$0xff]
  %v556 = vld [vmem:[%s2 + $0x2e8] sm:$0xff]
  %v557 = vld [vmem:[%s2 + $0x2f0] sm:$0xff]
  %v558 = vld [vmem:[%s2 + $0x2f8] sm:$0xff]
  %v559 = vld [vmem:[%s2 + $0x300] sm:$0xff]
  %v560 = vld [vmem:[%s2 + $0x308] sm:$0xff]
  %v561 = vld [vmem:[%s2 + $0x310] sm:$0xff]
  %v562 = vld [vmem:[%s2 + $0x318] sm:$0xff]
  %v563 = vld [vmem:[%s2 + $0x320] sm:$0xff]
  %v564 = vld [vmem:[%s2 + $0x328] sm:$0xff]
  %v565 = vld [vmem:[%s2 + $0x330] sm:$0xff]
  %v566 = vld [vmem:[%s2 + $0x338] sm:$0xff]
  %v567 = vld [vmem:[%s2 + $0x340] sm:$0xff]
  %v568 = vld [vmem:[%s2 + $0x348] sm:$0xff]
  %v569 = vld [vmem:[%s2 + $0x350] sm:$0xff]
  %v570 = vld [vmem:[%s2 + $0x358] sm:$0xff]
  %v571 = vld [vmem:[%s2 + $0x360] sm:$0xff]
  %v572 = vld [vmem:[%s2 + $0x368] sm:$0xff]
  %v573 = vld [vmem:[%s2 + $0x370] sm:$0xff]
  %v574 = vld [vmem:[%s2 + $0x378] sm:$0xff]
  %v575 = vld [vmem:[%s2 + $0x380] sm:$0xff]
  %v576 = vld [vmem:[%s2 + $0x388] sm:$0xff]
  %v577 = vld [vmem:[%s2 + $0x390] sm:$0xff]
  %v578 = vld [vmem:[%s2 + $0x398] sm:$0xff]
  %v579 = vld [vmem:[%s2 + $0x3a0] sm:$0xff]
  %v580 = vld [vmem:[%s2 + $0x3a8] sm:$0xff]
  %v581 = vld [vmem:[%s2 + $0x3b0] sm:$0xff]
  %v582 = vld [vmem:[%s2 + $0x3b8] sm:$0xff]
  %v583 = vld [vmem:[%s2 + $0x3c0] sm:$0xff]
  %v584 = vld [vmem:[%s2 + $0x3c8] sm:$0xff]
  %v585 = vld [vmem:[%s2 + $0x3d0] sm:$0xff]
  %v586 = vld [vmem:[%s2 + $0x3d8] sm:$0xff]
  %v587 = vld [vmem:[%s2 + $0x3e0] sm:$0xff]
  %v588 = vld [vmem:[%s2 + $0x3e8] sm:$0xff]
  %v589 = vld [vmem:[%s2 + $0x3f0] sm:$0xff]
  %v590 = vld [vmem:[%s2 + $0x3f8] sm:$0xff]
  %v591 = vld [vmem:[%s2 + $0x400] sm:$0xff]
  %v592 = vld [vmem:[%s2 + $0x408] sm:$0xff]
  %v593 = vld [vmem:[%s2 + $0x410] sm:$0xff]
  %v594 = vld [vmem:[%s2 + $0x418] sm:$0xff]
  %v595 = vld [vmem:[%s2 + $0x420] sm:$0xff]
  %v596 = vld [vmem:[%s2 + $0x428] sm:$0xff]
  %v597 = vld [vmem:[%s2 + $0x430] sm:$0xff]
  %v598 = vld [vmem:[%s2 + $0x438] sm:$0xff]
  %v599 = vld [vmem:[%s2 + $0x440] sm:$0xff]
  %v600 = vld [vmem:[%s2 + $0x448] sm:$0xff]
  %v601 = vld [vmem:[%s2 + $0x450] sm:$0xff]
  %v602 = vld [vmem:[%s2 + $0x458] sm:$0xff]
  %v603 = vld [vmem:[%s2 + $0x460] sm:$0xff]
  %v604 = vld [vmem:[%s2 + $0x468] sm:$0xff]
  %v605 = vld [vmem:[%s2 + $0x470] sm:$0xff]
  %v606 = vld [vmem:[%s2 + $0x478] sm:$0xff]
  %v607 = vld [vmem:[%s2 + $0x480] sm:$0xff]
  %v608 = vld [vmem:[%s2 + $0x488] sm:$0xff]
  %v609 = vld [vmem:[%s2 + $0x490] sm:$0xff]
  %v610 = vld [vmem:[%s2 + $0x498] sm:$0xff]
  %v611 = vld [vmem:[%s2 + $0x4a0] sm:$0xff]
  %v612 = vld [vmem:[%s2 + $0x4a8] sm:$0xff]
  %v613 = vld [vmem:[%s2 + $0x4b0] sm:$0xff]
  %v614 = vld [vmem:[%s2 + $0x4b8] sm:$0xff]
  %v615 = vld [vmem:[%s2 + $0x4c0] sm:$0xff]
  %v616 = vld [vmem:[%s2 + $0x4c8] sm:$0xff]
  %v617 = vld [vmem:[%s2 + $0x4d0] sm:$0xff]
  %v618 = vld [vmem:[%s2 + $0x4d8] sm:$0xff]
  %v619 = vld [vmem:[%s2 + $0x4e0] sm:$0xff]
  %v620 = vld [vmem:[%s2 + $0x4e8] sm:$0xff]
  %v621 = vld [vmem:[%s2 + $0x4f0] sm:$0xff]
  %v622 = vld [vmem:[%s2 + $0x4f8] sm:$0xff]
  %v623 = vld [vmem:[%s2 + $0x500] sm:$0xff]
  %v624 = vld [vmem:[%s2 + $0x508] sm:$0xff]
  %v625 = vld [vmem:[%s2 + $0x510] sm:$0xff]
  %v626 = vld [vmem:[%s2 + $0x518] sm:$0xff]
  %v627 = vld [vmem:[%s2 + $0x520] sm:$0xff]
  %v628 = vld [vmem:[%s2 + $0x528] sm:$0xff]
  %v629 = vld [vmem:[%s2 + $0x530] sm:$0xff]
  %v630 = vld [vmem:[%s2 + $0x538] sm:$0xff]
  %v631 = vld [vmem:[%s2 + $0x540] sm:$0xff]
  %v632 = vld [vmem:[%s2 + $0x548] sm:$0xff]
  %v633 = vld [vmem:[%s2 + $0x550] sm:$0xff]
  %v634 = vld [vmem:[%s2 + $0x558] sm:$0xff]
  %v635 = vld [vmem:[%s2 + $0x560] sm:$0xff]
  %v636 = vld [vmem:[%s2 + $0x568] sm:$0xff]
  %v637 = vld [vmem:[%s2 + $0x570] sm:$0xff]
  %v638 = vld [vmem:[%s2 + $0x578] sm:$0xff]
  %v639 = vld [vmem:[%s2 + $0x580] sm:$0xff]
  %v640 = vld [vmem:[%s2 + $0x588] sm:$0xff]
  %v641 = vld [vmem:[%s2 + $0x590] sm:$0xff]
  %v642 = vld [vmem:[%s2 + $0x598] sm:$0xff]
  %v643 = vld [vmem:[%s2 + $0x5a0] sm:$0xff]
  %v644 = vld [vmem:[%s2 + $0x5a8] sm:$0xff]
  %v645 = vld [vmem:[%s2 + $0x5b0] sm:$0xff]
  %v646 = vld [vmem:[%s2 + $0x5b8] sm:$0xff]
  %v647 = vld [vmem:[%s2 + $0x5c0] sm:$0xff]
  %v648 = vld [vmem:[%s2 + $0x5c8] sm:$0xff]
  %v649 = vld [vmem:[%s2 + $0x5d0] sm:$0xff]
  %v650 = vld [vmem:[%s2 + $0x5d8] sm:$0xff]
  %v651 = vld [vmem:[%s2 + $0x5e0] sm:$0xff]
  %v652 = vld [vmem:[%s2 + $0x5e8] sm:$0xff]
  %v653 = vld [vmem:[%s2 + $0x5f0] sm:$0xff]
  %v654 = vld [vmem:[%s2 + $0x5f8] sm:$0xff]
  %v655 = vld [vmem:[%s2 + $0x600] sm:$0xff]
  %v656 = vld [vmem:[%s2 + $0x608] sm:$0xff]
  %v657 = vld [vmem:[%s2 + $0x610] sm:$0xff]
  %v658 = vld [vmem:[%s2 + $0x618] sm:$0xff]
  %v659 = vld [vmem:[%s2 + $0x620] sm:$0xff]
  %v660 = vld [vmem:[%s2 + $0x628] sm:$0xff]
  %v661 = vld [vmem:[%s2 + $0x630] sm:$0xff]
  %v662 = vld [vmem:[%s2 + $0x638] sm:$0xff]
  %v663 = vld [vmem:[%s2 + $0x640] sm:$0xff]
  %v664 = vld [vmem:[%s2 + $0x648] sm:$0xff]
  %v665 = vld [vmem:[%s2 + $0x650] sm:$0xff]
  %v666 = vld [vmem:[%s2 + $0x658] sm:$0xff]
  %v667 = vld [vmem:[%s2 + $0x660] sm:$0xff]
  %v668 = vld [vmem:[%s2 + $0x668] sm:$0xff]
  %v669 = vld [vmem:[%s2 + $0x670] sm:$0xff]
  %v670 = vld [vmem:[%s2 + $0x678] sm:$0xff]
  %v671 = vld [vmem:[%s2 + $0x680] sm:$0xff]
  %v672 = vld [vmem:[%s2 + $0x688] sm:$0xff]
  %v673 = vld [vmem:[%s2 + $0x690] sm:$0xff]
  %v674 = vld [vmem:[%s2 + $0x698] sm:$0xff]
  %v675 = vld [vmem:[%s2 + $0x6a0] sm:$0xff]
  %v676 = vld [vmem:[%s2 + $0x6a8] sm:$0xff]
  %v677 = vld [vmem:[%s2 + $0x6b0] sm:$0xff]
  %v678 = vld [vmem:[%s2 + $0x6b8] sm:$0xff]
  %v679 = vld [vmem:[%s2 + $0x6c0] sm:$0xff]
  %v680 = vld [vmem:[%s2 + $0x6c8] sm:$0xff]
  %v681 = vld [vmem:[%s2 + $0x6d0] sm:$0xff]
  %v682 = vld [vmem:[%s2 + $0x6d8] sm:$0xff]
  %v683 = vld [vmem:[%s2 + $0x6e0] sm:$0xff]
  %v684 = vld [vmem:[%s2 + $0x6e8] sm:$0xff]
  %v685 = vld [vmem:[%s2 + $0x6f0] sm:$0xff]
  %v686 = vld [vmem:[%s2 + $0x6f8] sm:$0xff]
  %v687 = vld [vmem:[%s2 + $0x700] sm:$0xff]
  %v688 = vld [vmem:[%s2 + $0x708] sm:$0xff]
  %v689 = vld [vmem:[%s2 + $0x710] sm:$0xff]
  %v690 = vld [vmem:[%s2 + $0x718] sm:$0xff]
  %v691 = vld [vmem:[%s2 + $0x720] sm:$0xff]
  %v692 = vld [vmem:[%s2 + $0x728] sm:$0xff]
  %v693 = vld [vmem:[%s2 + $0x730] sm:$0xff]
  %v694 = vld [vmem:[%s2 + $0x738] sm:$0xff]
  %v695 = vld [vmem:[%s2 + $0x740] sm:$0xff]
  %v696 = vld [vmem:[%s2 + $0x748] sm:$0xff]
  %v697 = vld [vmem:[%s2 + $0x750] sm:$0xff]
  %v698 = vld [vmem:[%s2 + $0x758] sm:$0xff]
  %v699 = vld [vmem:[%s2 + $0x760] sm:$0xff]
  %v700 = vld [vmem:[%s2 + $0x768] sm:$0xff]
  %v701 = vld [vmem:[%s2 + $0x770] sm:$0xff]
  %v702 = vld [vmem:[%s2 + $0x778] sm:$0xff]
  %v703 = vpack.c.bf16 %v465, %v463
  %v704 = vpack.c.bf16 %v466, %v464
  %v705 = vpack.c.bf16 %v469, %v467
  %v706 = vpack.c.bf16 %v470, %v468
  %v707 = vpack.c.bf16 %v473, %v471
  %v708 = vpack.c.bf16 %v474, %v472
  %v709 = vpack.c.bf16 %v477, %v475
  %v710 = vpack.c.bf16 %v478, %v476
  %v711 = vpack.c.bf16 %v481, %v479
  %v712 = vpack.c.bf16 %v482, %v480
  %v713 = vpack.c.bf16 %v485, %v483
  %v714 = vpack.c.bf16 %v486, %v484
  %v715 = vpack.c.bf16 %v489, %v487
  %v716 = vpack.c.bf16 %v490, %v488
  %v717 = vpack.c.bf16 %v493, %v491
  %v718 = vpack.c.bf16 %v494, %v492
  %v719 = vpack.c.bf16 %v497, %v495
  %v720 = vpack.c.bf16 %v498, %v496
  %v721 = vpack.c.bf16 %v501, %v499
  %v722 = vpack.c.bf16 %v502, %v500
  %v723 = vpack.c.bf16 %v505, %v503
  %v724 = vpack.c.bf16 %v506, %v504
  %v725 = vpack.c.bf16 %v509, %v507
  %v726 = vpack.c.bf16 %v510, %v508
  %v727 = vpack.c.bf16 %v513, %v511
  %v728 = vpack.c.bf16 %v514, %v512
  %v729 = vpack.c.bf16 %v517, %v515
  %v730 = vpack.c.bf16 %v518, %v516
  %v731 = vpack.c.bf16 %v521, %v519
  %v732 = vpack.c.bf16 %v522, %v520
  %v733 = vpack.c.bf16 %v525, %v523
  %v734 = vpack.c.bf16 %v526, %v524
  %v735 = vpack.c.bf16 %v529, %v527
  %v736 = vpack.c.bf16 %v530, %v528
  %v737 = vpack.c.bf16 %v533, %v531
  %v738 = vpack.c.bf16 %v534, %v532
  %v739 = vpack.c.bf16 %v537, %v535
  %v740 = vpack.c.bf16 %v538, %v536
  %v741 = vpack.c.bf16 %v541, %v539
  %v742 = vpack.c.bf16 %v542, %v540
  %v743 = vpack.c.bf16 %v545, %v543
  %v744 = vpack.c.bf16 %v546, %v544
  %v745 = vpack.c.bf16 %v549, %v547
  %v746 = vpack.c.bf16 %v550, %v548
  %v747 = vpack.c.bf16 %v553, %v551
  %v748 = vpack.c.bf16 %v554, %v552
  %v749 = vpack.c.bf16 %v557, %v555
  %v750 = vpack.c.bf16 %v558, %v556
  %v751 = vpack.c.bf16 %v561, %v559
  %v752 = vpack.c.bf16 %v562, %v560
  %v753 = vpack.c.bf16 %v565, %v563
  %v754 = vpack.c.bf16 %v566, %v564
  %v755 = vpack.c.bf16 %v569, %v567
  %v756 = vpack.c.bf16 %v570, %v568
  %v757 = vpack.c.bf16 %v573, %v571
  %v758 = vpack.c.bf16 %v574, %v572
  %v759 = vpack.c.bf16 %v577, %v575
  %v760 = vpack.c.bf16 %v578, %v576
  %v761 = vpack.c.bf16 %v581, %v579
  %v762 = vpack.c.bf16 %v582, %v580
  %v763 = vpack.c.bf16 %v585, %v583
  %v764 = vpack.c.bf16 %v586, %v584
  %v765 = vpack.c.bf16 %v589, %v587
  %v766 = vpack.c.bf16 %v590, %v588
  %v767 = vpack.c.bf16 %v593, %v591
  %v768 = vpack.c.bf16 %v594, %v592
  %v769 = vpack.c.bf16 %v597, %v595
  %v770 = vpack.c.bf16 %v598, %v596
  %v771 = vpack.c.bf16 %v601, %v599
  %v772 = vpack.c.bf16 %v602, %v600
  %v773 = vpack.c.bf16 %v605, %v603
  %v774 = vpack.c.bf16 %v606, %v604
  %v775 = vpack.c.bf16 %v609, %v607
  %v776 = vpack.c.bf16 %v610, %v608
  %v777 = vpack.c.bf16 %v613, %v611
  %v778 = vpack.c.bf16 %v614, %v612
  %v779 = vpack.c.bf16 %v617, %v615
  %v780 = vpack.c.bf16 %v618, %v616
  %v781 = vpack.c.bf16 %v621, %v619
  %v782 = vpack.c.bf16 %v622, %v620
  %v783 = vpack.c.bf16 %v625, %v623
  %v784 = vpack.c.bf16 %v626, %v624
  %v785 = vpack.c.bf16 %v629, %v627
  %v786 = vpack.c.bf16 %v630, %v628
  %v787 = vpack.c.bf16 %v633, %v631
  %v788 = vpack.c.bf16 %v634, %v632
  %v789 = vpack.c.bf16 %v637, %v635
  %v790 = vpack.c.bf16 %v638, %v636
  %v791 = vpack.c.bf16 %v641, %v639
  %v792 = vpack.c.bf16 %v642, %v640
  %v793 = vpack.c.bf16 %v645, %v643
  %v794 = vpack.c.bf16 %v646, %v644
  %v795 = vpack.c.bf16 %v649, %v647
  %v796 = vpack.c.bf16 %v650, %v648
  %v797 = vpack.c.bf16 %v653, %v651
  %v798 = vpack.c.bf16 %v654, %v652
  %v799 = vpack.c.bf16 %v657, %v655
  %v800 = vpack.c.bf16 %v658, %v656
  %v801 = vpack.c.bf16 %v661, %v659
  %v802 = vpack.c.bf16 %v662, %v660
  %v803 = vpack.c.bf16 %v665, %v663
  %v804 = vpack.c.bf16 %v666, %v664
  %v805 = vpack.c.bf16 %v669, %v667
  %v806 = vpack.c.bf16 %v670, %v668
  %v807 = vpack.c.bf16 %v673, %v671
  %v808 = vpack.c.bf16 %v674, %v672
  %v809 = vpack.c.bf16 %v677, %v675
  %v810 = vpack.c.bf16 %v678, %v676
  %v811 = vpack.c.bf16 %v681, %v679
  %v812 = vpack.c.bf16 %v682, %v680
  %v813 = vpack.c.bf16 %v685, %v683
  %v814 = vpack.c.bf16 %v686, %v684
  %v815 = vpack.c.bf16 %v689, %v687
  %v816 = vpack.c.bf16 %v690, %v688
  %v817 = vpack.c.bf16 %v693, %v691
  %v818 = vpack.c.bf16 %v694, %v692
  %v819 = vpack.c.bf16 %v697, %v695
  %v820 = vpack.c.bf16 %v698, %v696
  %v821 = vpack.c.bf16 %v701, %v699
  %v822 = vpack.c.bf16 %v702, %v700
  %vm823 = vcmask 523264
  %v825 = vsel %vm823, %v390, 0
  %v828 = vsel %vm823, %v398, 0
  %v831 = vsel %vm823, %v406, 0
  %v834 = vsel %vm823, %v414, 0
  %v837 = vsel %vm823, %v422, 0
  %v840 = vsel %vm823, %v430, 0
  %v843 = vsel %vm823, %v438, 0
  %v846 = vsel %vm823, %v446, 0
  %v849 = vsel %vm823, %v454, 0
  %v852 = vsel %vm823, %v462, 0
  %854 = vmatprep.subr.bf16.mxu0 %v718
  %855 = vmatpush1.bf16.msra.mxu0 %v717
  %856 = vmatprep.subr.bf16.mxu0 %v716
  %857 = vmatpush1.bf16.msra.mxu0 %v715
  %858 = vmatprep.subr.bf16.mxu0 %v714
  %859 = vmatpush1.bf16.msra.mxu0 %v713
  %860 = vmatprep.subr.bf16.mxu0 %v712
  %861 = vmatpush1.bf16.msra.mxu0 %v711
  %862 = vmatprep.subr.bf16.mxu0 %v710
  %863 = vmatpush1.bf16.msra.mxu0 %v709
  %864 = vmatprep.subr.bf16.mxu0 %v708
  %865 = vmatpush1.bf16.msra.mxu0 %v707
  %866 = vmatprep.subr.bf16.mxu0 %v706
  %867 = vmatpush1.bf16.msra.mxu0 %v705
  %868 = vmatprep.subr.bf16.mxu0 %v704
  %869 = vmatpush1.bf16.msra.mxu0 %v703
  %870 = vmatprep.subr.bf16.mxu0 %v734
  %871 = vmatpush2.bf16.msra.mxu0 %v733
  %872 = vmatprep.subr.bf16.mxu0 %v732
  %873 = vmatpush2.bf16.msra.mxu0 %v731
  %874 = vmatprep.subr.bf16.mxu0 %v730
  %875 = vmatpush2.bf16.msra.mxu0 %v729
  %876 = vmatprep.subr.bf16.mxu0 %v728
  %877 = vmatpush2.bf16.msra.mxu0 %v727
  %878 = vmatprep.subr.bf16.mxu0 %v726
  %879 = vmatpush2.bf16.msra.mxu0 %v725
  %880 = vmatprep.subr.bf16.mxu0 %v724
  %881 = vmatpush2.bf16.msra.mxu0 %v723
  %882 = vmatprep.subr.bf16.mxu0 %v722
  %883 = vmatpush2.bf16.msra.mxu0 %v721
  %884 = vmatprep.subr.bf16.mxu0 %v720
  %885 = vmatpush2.bf16.msra.mxu0 %v719
  %886 = vmatprep.mubr.bf16.mxu0 %v384
  %887 = vmatmul.mubr.bf16.gmra.mxu0 %v383
  %v888 = vpop.f32.mrf.mxu0
  %v889 = vadd.f32 0.0, %v888
  %v890 = vpop.f32.mrf.mxu0
  %v891 = vadd.f32 0.0, %v890
  %v892 = vpop.f32.mrf.mxu0
  %v893 = vadd.f32 0.0, %v892
  %v894 = vpop.f32.mrf.mxu0
  %v895 = vadd.f32 0.0, %v894
  %896 = vmatprep.mubr.bf16.mxu0 %v392
  %897 = vmatmul.mubr.bf16.gmra.mxu0 %v391
  %v898 = vpop.f32.mrf.mxu0
  %v899 = vadd.f32 0.0, %v898
  %v900 = vpop.f32.mrf.mxu0
  %v901 = vadd.f32 0.0, %v900
  %v902 = vpop.f32.mrf.mxu0
  %v903 = vadd.f32 0.0, %v902
  %v904 = vpop.f32.mrf.mxu0
  %v905 = vadd.f32 0.0, %v904
  %906 = vmatprep.mubr.bf16.mxu0 %v400
  %907 = vmatmul.mubr.bf16.gmra.mxu0 %v399
  %v908 = vpop.f32.mrf.mxu0
  %v909 = vadd.f32 0.0, %v908
  %v910 = vpop.f32.mrf.mxu0
  %v911 = vadd.f32 0.0, %v910
  %v912 = vpop.f32.mrf.mxu0
  %v913 = vadd.f32 0.0, %v912
  %v914 = vpop.f32.mrf.mxu0
  %v915 = vadd.f32 0.0, %v914
  %916 = vmatprep.mubr.bf16.mxu0 %v408
  %917 = vmatmul.mubr.bf16.gmra.mxu0 %v407
  %v918 = vpop.f32.mrf.mxu0
  %v919 = vadd.f32 0.0, %v918
  %v920 = vpop.f32.mrf.mxu0
  %v921 = vadd.f32 0.0, %v920
  %v922 = vpop.f32.mrf.mxu0
  %v923 = vadd.f32 0.0, %v922
  %v924 = vpop.f32.mrf.mxu0
  %v925 = vadd.f32 0.0, %v924
  %926 = vmatprep.mubr.bf16.mxu0 %v416
  %927 = vmatmul.mubr.bf16.gmra.mxu0 %v415
  %v928 = vpop.f32.mrf.mxu0
  %v929 = vadd.f32 0.0, %v928
  %v930 = vpop.f32.mrf.mxu0
  %v931 = vadd.f32 0.0, %v930
  %v932 = vpop.f32.mrf.mxu0
  %v933 = vadd.f32 0.0, %v932
  %v934 = vpop.f32.mrf.mxu0
  %v935 = vadd.f32 0.0, %v934
  %936 = vmatprep.mubr.bf16.mxu0 %v424
  %937 = vmatmul.mubr.bf16.gmra.mxu0 %v423
  %v938 = vpop.f32.mrf.mxu0
  %v939 = vadd.f32 0.0, %v938
  %v940 = vpop.f32.mrf.mxu0
  %v941 = vadd.f32 0.0, %v940
  %v942 = vpop.f32.mrf.mxu0
  %v943 = vadd.f32 0.0, %v942
  %v944 = vpop.f32.mrf.mxu0
  %v945 = vadd.f32 0.0, %v944
  %946 = vmatprep.mubr.bf16.mxu0 %v432
  %947 = vmatmul.mubr.bf16.gmra.mxu0 %v431
  %v948 = vpop.f32.mrf.mxu0
  %v949 = vadd.f32 0.0, %v948
  %v950 = vpop.f32.mrf.mxu0
  %v951 = vadd.f32 0.0, %v950
  %v952 = vpop.f32.mrf.mxu0
  %v953 = vadd.f32 0.0, %v952
  %v954 = vpop.f32.mrf.mxu0
  %v955 = vadd.f32 0.0, %v954
  %956 = vmatprep.mubr.bf16.mxu0 %v440
  %957 = vmatmul.mubr.bf16.gmra.mxu0 %v439
  %v958 = vpop.f32.mrf.mxu0
  %v959 = vadd.f32 0.0, %v958
  %v960 = vpop.f32.mrf.mxu0
  %v961 = vadd.f32 0.0, %v960
  %v962 = vpop.f32.mrf.mxu0
  %v963 = vadd.f32 0.0, %v962
  %v964 = vpop.f32.mrf.mxu0
  %v965 = vadd.f32 0.0, %v964
  %966 = vmatprep.mubr.bf16.mxu0 %v448
  %967 = vmatmul.mubr.bf16.gmra.mxu0 %v447
  %v968 = vpop.f32.mrf.mxu0
  %v969 = vadd.f32 0.0, %v968
  %v970 = vpop.f32.mrf.mxu0
  %v971 = vadd.f32 0.0, %v970
  %v972 = vpop.f32.mrf.mxu0
  %v973 = vadd.f32 0.0, %v972
  %v974 = vpop.f32.mrf.mxu0
  %v975 = vadd.f32 0.0, %v974
  %976 = vmatprep.mubr.bf16.mxu0 %v456
  %977 = vmatmul.mubr.bf16.gmra.mxu0 %v455
  %v978 = vpop.f32.mrf.mxu0
  %v979 = vadd.f32 0.0, %v978
  %v980 = vpop.f32.mrf.mxu0
  %v981 = vadd.f32 0.0, %v980
  %v982 = vpop.f32.mrf.mxu0
  %v983 = vadd.f32 0.0, %v982
  %v984 = vpop.f32.mrf.mxu0
  %v985 = vadd.f32 0.0, %v984
  %986 = vdwg.mxu0
  %987 = vmatprep.subr.bf16.mxu0 %v750
  %988 = vmatpush1.bf16.msra.mxu0 %v749
  %989 = vmatprep.subr.bf16.mxu0 %v748
  %990 = vmatpush1.bf16.msra.mxu0 %v747
  %991 = vmatprep.subr.bf16.mxu0 %v746
  %992 = vmatpush1.bf16.msra.mxu0 %v745
  %993 = vmatprep.subr.bf16.mxu0 %v744
  %994 = vmatpush1.bf16.msra.mxu0 %v743
  %995 = vmatprep.subr.bf16.mxu0 %v742
  %996 = vmatpush1.bf16.msra.mxu0 %v741
  %997 = vmatprep.subr.bf16.mxu0 %v740
  %998 = vmatpush1.bf16.msra.mxu0 %v739
  %999 = vmatprep.subr.bf16.mxu0 %v738
  %1000 = vmatpush1.bf16.msra.mxu0 %v737
  %1001 = vmatprep.subr.bf16.mxu0 %v736
  %1002 = vmatpush1.bf16.msra.mxu0 %v735
  %1003 = vmatprep.subr.bf16.mxu0 %v766
  %1004 = vmatpush2.bf16.msra.mxu0 %v765
  %1005 = vmatprep.subr.bf16.mxu0 %v764
  %1006 = vmatpush2.bf16.msra.mxu0 %v763
  %1007 = vmatprep.subr.bf16.mxu0 %v762
  %1008 = vmatpush2.bf16.msra.mxu0 %v761
  %1009 = vmatprep.subr.bf16.mxu0 %v760
  %1010 = vmatpush2.bf16.msra.mxu0 %v759
  %1011 = vmatprep.subr.bf16.mxu0 %v758
  %1012 = vmatpush2.bf16.msra.mxu0 %v757
  %1013 = vmatprep.subr.bf16.mxu0 %v756
  %1014 = vmatpush2.bf16.msra.mxu0 %v755
  %1015 = vmatprep.subr.bf16.mxu0 %v754
  %1016 = vmatpush2.bf16.msra.mxu0 %v753
  %1017 = vmatprep.subr.bf16.mxu0 %v752
  %1018 = vmatpush2.bf16.msra.mxu0 %v751
  %1019 = vmatprep.mubr.bf16.mxu0 %v386
  %1020 = vmatmul.mubr.bf16.gmra.mxu0 %v385
  %v1021 = vpop.f32.mrf.mxu0
  %v1022 = vadd.f32 %v889, %v1021
  %v1023 = vpop.f32.mrf.mxu0
  %v1024 = vadd.f32 %v891, %v1023
  %v1025 = vpop.f32.mrf.mxu0
  %v1026 = vadd.f32 %v893, %v1025
  %v1027 = vpop.f32.mrf.mxu0
  %v1028 = vadd.f32 %v895, %v1027
  %1029 = vmatprep.mubr.bf16.mxu0 %v394
  %1030 = vmatmul.mubr.bf16.gmra.mxu0 %v393
  %v1031 = vpop.f32.mrf.mxu0
  %v1032 = vadd.f32 %v899, %v1031
  %v1033 = vpop.f32.mrf.mxu0
  %v1034 = vadd.f32 %v901, %v1033
  %v1035 = vpop.f32.mrf.mxu0
  %v1036 = vadd.f32 %v903, %v1035
  %v1037 = vpop.f32.mrf.mxu0
  %v1038 = vadd.f32 %v905, %v1037
  %1039 = vmatprep.mubr.bf16.mxu0 %v402
  %1040 = vmatmul.mubr.bf16.gmra.mxu0 %v401
  %v1041 = vpop.f32.mrf.mxu0
  %v1042 = vadd.f32 %v909, %v1041
  %v1043 = vpop.f32.mrf.mxu0
  %v1044 = vadd.f32 %v911, %v1043
  %v1045 = vpop.f32.mrf.mxu0
  %v1046 = vadd.f32 %v913, %v1045
  %v1047 = vpop.f32.mrf.mxu0
  %v1048 = vadd.f32 %v915, %v1047
  %1049 = vmatprep.mubr.bf16.mxu0 %v410
  %1050 = vmatmul.mubr.bf16.gmra.mxu0 %v409
  %v1051 = vpop.f32.mrf.mxu0
  %v1052 = vadd.f32 %v919, %v1051
  %v1053 = vpop.f32.mrf.mxu0
  %v1054 = vadd.f32 %v921, %v1053
  %v1055 = vpop.f32.mrf.mxu0
  %v1056 = vadd.f32 %v923, %v1055
  %v1057 = vpop.f32.mrf.mxu0
  %v1058 = vadd.f32 %v925, %v1057
  %1059 = vmatprep.mubr.bf16.mxu0 %v418
  %1060 = vmatmul.mubr.bf16.gmra.mxu0 %v417
  %v1061 = vpop.f32.mrf.mxu0
  %v1062 = vadd.f32 %v929, %v1061
  %v1063 = vpop.f32.mrf.mxu0
  %v1064 = vadd.f32 %v931, %v1063
  %v1065 = vpop.f32.mrf.mxu0
  %v1066 = vadd.f32 %v933, %v1065
  %v1067 = vpop.f32.mrf.mxu0
  %v1068 = vadd.f32 %v935, %v1067
  %1069 = vmatprep.mubr.bf16.mxu0 %v426
  %1070 = vmatmul.mubr.bf16.gmra.mxu0 %v425
  %v1071 = vpop.f32.mrf.mxu0
  %v1072 = vadd.f32 %v939, %v1071
  %v1073 = vpop.f32.mrf.mxu0
  %v1074 = vadd.f32 %v941, %v1073
  %v1075 = vpop.f32.mrf.mxu0
  %v1076 = vadd.f32 %v943, %v1075
  %v1077 = vpop.f32.mrf.mxu0
  %v1078 = vadd.f32 %v945, %v1077
  %1079 = vmatprep.mubr.bf16.mxu0 %v434
  %1080 = vmatmul.mubr.bf16.gmra.mxu0 %v433
  %v1081 = vpop.f32.mrf.mxu0
  %v1082 = vadd.f32 %v949, %v1081
  %v1083 = vpop.f32.mrf.mxu0
  %v1084 = vadd.f32 %v951, %v1083
  %v1085 = vpop.f32.mrf.mxu0
  %v1086 = vadd.f32 %v953, %v1085
  %v1087 = vpop.f32.mrf.mxu0
  %v1088 = vadd.f32 %v955, %v1087
  %1089 = vmatprep.mubr.bf16.mxu0 %v442
  %1090 = vmatmul.mubr.bf16.gmra.mxu0 %v441
  %v1091 = vpop.f32.mrf.mxu0
  %v1092 = vadd.f32 %v959, %v1091
  %v1093 = vpop.f32.mrf.mxu0
  %v1094 = vadd.f32 %v961, %v1093
  %v1095 = vpop.f32.mrf.mxu0
  %v1096 = vadd.f32 %v963, %v1095
  %v1097 = vpop.f32.mrf.mxu0
  %v1098 = vadd.f32 %v965, %v1097
  %1099 = vmatprep.mubr.bf16.mxu0 %v450
  %1100 = vmatmul.mubr.bf16.gmra.mxu0 %v449
  %v1101 = vpop.f32.mrf.mxu0
  %v1102 = vadd.f32 %v969, %v1101
  %v1103 = vpop.f32.mrf.mxu0
  %v1104 = vadd.f32 %v971, %v1103
  %v1105 = vpop.f32.mrf.mxu0
  %v1106 = vadd.f32 %v973, %v1105
  %v1107 = vpop.f32.mrf.mxu0
  %v1108 = vadd.f32 %v975, %v1107
  %1109 = vmatprep.mubr.bf16.mxu0 %v458
  %1110 = vmatmul.mubr.bf16.gmra.mxu0 %v457
  %v1111 = vpop.f32.mrf.mxu0
  %v1112 = vadd.f32 %v979, %v1111
  %v1113 = vpop.f32.mrf.mxu0
  %v1114 = vadd.f32 %v981, %v1113
  %v1115 = vpop.f32.mrf.mxu0
  %v1116 = vadd.f32 %v983, %v1115
  %v1117 = vpop.f32.mrf.mxu0
  %v1118 = vadd.f32 %v985, %v1117
  %1119 = vdwg.mxu0
  %1120 = vmatprep.subr.bf16.mxu0 %v782
  %1121 = vmatpush1.bf16.msra.mxu0 %v781
  %1122 = vmatprep.subr.bf16.mxu0 %v780
  %1123 = vmatpush1.bf16.msra.mxu0 %v779
  %1124 = vmatprep.subr.bf16.mxu0 %v778
  %1125 = vmatpush1.bf16.msra.mxu0 %v777
  %1126 = vmatprep.subr.bf16.mxu0 %v776
  %1127 = vmatpush1.bf16.msra.mxu0 %v775
  %1128 = vmatprep.subr.bf16.mxu0 %v774
  %1129 = vmatpush1.bf16.msra.mxu0 %v773
  %1130 = vmatprep.subr.bf16.mxu0 %v772
  %1131 = vmatpush1.bf16.msra.mxu0 %v771
  %1132 = vmatprep.subr.bf16.mxu0 %v770
  %1133 = vmatpush1.bf16.msra.mxu0 %v769
  %1134 = vmatprep.subr.bf16.mxu0 %v768
  %1135 = vmatpush1.bf16.msra.mxu0 %v767
  %1136 = vmatprep.subr.bf16.mxu0 %v798
  %1137 = vmatpush2.bf16.msra.mxu0 %v797
  %1138 = vmatprep.subr.bf16.mxu0 %v796
  %1139 = vmatpush2.bf16.msra.mxu0 %v795
  %1140 = vmatprep.subr.bf16.mxu0 %v794
  %1141 = vmatpush2.bf16.msra.mxu0 %v793
  %1142 = vmatprep.subr.bf16.mxu0 %v792
  %1143 = vmatpush2.bf16.msra.mxu0 %v791
  %1144 = vmatprep.subr.bf16.mxu0 %v790
  %1145 = vmatpush2.bf16.msra.mxu0 %v789
  %1146 = vmatprep.subr.bf16.mxu0 %v788
  %1147 = vmatpush2.bf16.msra.mxu0 %v787
  %1148 = vmatprep.subr.bf16.mxu0 %v786
  %1149 = vmatpush2.bf16.msra.mxu0 %v785
  %1150 = vmatprep.subr.bf16.mxu0 %v784
  %1151 = vmatpush2.bf16.msra.mxu0 %v783
  %1152 = vmatprep.mubr.bf16.mxu0 %v388
  %1153 = vmatmul.mubr.bf16.gmra.mxu0 %v387
  %v1154 = vpop.f32.mrf.mxu0
  %v1155 = vadd.f32 %v1022, %v1154
  %v1156 = vpop.f32.mrf.mxu0
  %v1157 = vadd.f32 %v1024, %v1156
  %v1158 = vpop.f32.mrf.mxu0
  %v1159 = vadd.f32 %v1026, %v1158
  %v1160 = vpop.f32.mrf.mxu0
  %v1161 = vadd.f32 %v1028, %v1160
  %1162 = vmatprep.mubr.bf16.mxu0 %v396
  %1163 = vmatmul.mubr.bf16.gmra.mxu0 %v395
  %v1164 = vpop.f32.mrf.mxu0
  %v1165 = vadd.f32 %v1032, %v1164
  %v1166 = vpop.f32.mrf.mxu0
  %v1167 = vadd.f32 %v1034, %v1166
  %v1168 = vpop.f32.mrf.mxu0
  %v1169 = vadd.f32 %v1036, %v1168
  %v1170 = vpop.f32.mrf.mxu0
  %v1171 = vadd.f32 %v1038, %v1170
  %1172 = vmatprep.mubr.bf16.mxu0 %v404
  %1173 = vmatmul.mubr.bf16.gmra.mxu0 %v403
  %v1174 = vpop.f32.mrf.mxu0
  %v1175 = vadd.f32 %v1042, %v1174
  %v1176 = vpop.f32.mrf.mxu0
  %v1177 = vadd.f32 %v1044, %v1176
  %v1178 = vpop.f32.mrf.mxu0
  %v1179 = vadd.f32 %v1046, %v1178
  %v1180 = vpop.f32.mrf.mxu0
  %v1181 = vadd.f32 %v1048, %v1180
  %1182 = vmatprep.mubr.bf16.mxu0 %v412
  %1183 = vmatmul.mubr.bf16.gmra.mxu0 %v411
  %v1184 = vpop.f32.mrf.mxu0
  %v1185 = vadd.f32 %v1052, %v1184
  %v1186 = vpop.f32.mrf.mxu0
  %v1187 = vadd.f32 %v1054, %v1186
  %v1188 = vpop.f32.mrf.mxu0
  %v1189 = vadd.f32 %v1056, %v1188
  %v1190 = vpop.f32.mrf.mxu0
  %v1191 = vadd.f32 %v1058, %v1190
  %1192 = vmatprep.mubr.bf16.mxu0 %v420
  %1193 = vmatmul.mubr.bf16.gmra.mxu0 %v419
  %v1194 = vpop.f32.mrf.mxu0
  %v1195 = vadd.f32 %v1062, %v1194
  %v1196 = vpop.f32.mrf.mxu0
  %v1197 = vadd.f32 %v1064, %v1196
  %v1198 = vpop.f32.mrf.mxu0
  %v1199 = vadd.f32 %v1066, %v1198
  %v1200 = vpop.f32.mrf.mxu0
  %v1201 = vadd.f32 %v1068, %v1200
  %1202 = vmatprep.mubr.bf16.mxu0 %v428
  %1203 = vmatmul.mubr.bf16.gmra.mxu0 %v427
  %v1204 = vpop.f32.mrf.mxu0
  %v1205 = vadd.f32 %v1072, %v1204
  %v1206 = vpop.f32.mrf.mxu0
  %v1207 = vadd.f32 %v1074, %v1206
  %v1208 = vpop.f32.mrf.mxu0
  %v1209 = vadd.f32 %v1076, %v1208
  %v1210 = vpop.f32.mrf.mxu0
  %v1211 = vadd.f32 %v1078, %v1210
  %1212 = vmatprep.mubr.bf16.mxu0 %v436
  %1213 = vmatmul.mubr.bf16.gmra.mxu0 %v435
  %v1214 = vpop.f32.mrf.mxu0
  %v1215 = vadd.f32 %v1082, %v1214
  %v1216 = vpop.f32.mrf.mxu0
  %v1217 = vadd.f32 %v1084, %v1216
  %v1218 = vpop.f32.mrf.mxu0
  %v1219 = vadd.f32 %v1086, %v1218
  %v1220 = vpop.f32.mrf.mxu0
  %v1221 = vadd.f32 %v1088, %v1220
  %1222 = vmatprep.mubr.bf16.mxu0 %v444
  %1223 = vmatmul.mubr.bf16.gmra.mxu0 %v443
  %v1224 = vpop.f32.mrf.mxu0
  %v1225 = vadd.f32 %v1092, %v1224
  %v1226 = vpop.f32.mrf.mxu0
  %v1227 = vadd.f32 %v1094, %v1226
  %v1228 = vpop.f32.mrf.mxu0
  %v1229 = vadd.f32 %v1096, %v1228
  %v1230 = vpop.f32.mrf.mxu0
  %v1231 = vadd.f32 %v1098, %v1230
  %1232 = vmatprep.mubr.bf16.mxu0 %v452
  %1233 = vmatmul.mubr.bf16.gmra.mxu0 %v451
  %v1234 = vpop.f32.mrf.mxu0
  %v1235 = vadd.f32 %v1102, %v1234
  %v1236 = vpop.f32.mrf.mxu0
  %v1237 = vadd.f32 %v1104, %v1236
  %v1238 = vpop.f32.mrf.mxu0
  %v1239 = vadd.f32 %v1106, %v1238
  %v1240 = vpop.f32.mrf.mxu0
  %v1241 = vadd.f32 %v1108, %v1240
  %1242 = vmatprep.mubr.bf16.mxu0 %v460
  %1243 = vmatmul.mubr.bf16.gmra.mxu0 %v459
  %v1244 = vpop.f32.mrf.mxu0
  %v1245 = vadd.f32 %v1112, %v1244
  %v1246 = vpop.f32.mrf.mxu0
  %v1247 = vadd.f32 %v1114, %v1246
  %v1248 = vpop.f32.mrf.mxu0
  %v1249 = vadd.f32 %v1116, %v1248
  %v1250 = vpop.f32.mrf.mxu0
  %v1251 = vadd.f32 %v1118, %v1250
  %1252 = vdwg.mxu0
  %1253 = vmatprep.subr.bf16.mxu0 %v814
  %1254 = vmatpush1.bf16.msra.mxu0 %v813
  %1255 = vmatprep.subr.bf16.mxu0 %v812
  %1256 = vmatpush1.bf16.msra.mxu0 %v811
  %1257 = vmatprep.subr.bf16.mxu0 %v810
  %1258 = vmatpush1.bf16.msra.mxu0 %v809
  %1259 = vmatprep.subr.bf16.mxu0 %v808
  %1260 = vmatpush1.bf16.msra.mxu0 %v807
  %1261 = vmatprep.subr.bf16.mxu0 %v806
  %1262 = vmatpush1.bf16.msra.mxu0 %v805
  %1263 = vmatprep.subr.bf16.mxu0 %v804
  %1264 = vmatpush1.bf16.msra.mxu0 %v803
  %1265 = vmatprep.subr.bf16.mxu0 %v802
  %1266 = vmatpush1.bf16.msra.mxu0 %v801
  %1267 = vmatprep.subr.bf16.mxu0 %v800
  %1268 = vmatpush1.bf16.msra.mxu0 %v799
  %1269 = vmatprep.subr.bf16.mxu0 0
  %1270 = vmatpush2.bf16.msra.mxu0 0
  %1271 = vmatprep.subr.bf16.mxu0 0
  %1272 = vmatpush2.bf16.msra.mxu0 0
  %1273 = vmatprep.subr.bf16.mxu0 0
  %1274 = vmatpush2.bf16.msra.mxu0 0
  %1275 = vmatprep.subr.bf16.mxu0 0
  %1276 = vmatpush2.bf16.msra.mxu0 0
  %1277 = vmatprep.subr.bf16.mxu0 %v822
  %1278 = vmatpush2.bf16.msra.mxu0 %v821
  %1279 = vmatprep.subr.bf16.mxu0 %v820
  %1280 = vmatpush2.bf16.msra.mxu0 %v819
  %1281 = vmatprep.subr.bf16.mxu0 %v818
  %1282 = vmatpush2.bf16.msra.mxu0 %v817
  %1283 = vmatprep.subr.bf16.mxu0 %v816
  %1284 = vmatpush2.bf16.msra.mxu0 %v815
  %1285 = vmatprep.mubr.bf16.mxu0 %v825
  %1286 = vmatmul.mubr.bf16.gmra.mxu0 %v389
  %v1287 = vpop.f32.mrf.mxu0
  %v1288 = vadd.f32 %v1155, %v1287
  %v1289 = vpop.f32.mrf.mxu0
  %v1290 = vadd.f32 %v1157, %v1289
  %v1291 = vpop.f32.mrf.mxu0
  %v1292 = vadd.f32 %v1159, %v1291
  %v1293 = vpop.f32.mrf.mxu0
  %v1294 = vadd.f32 %v1161, %v1293
  %1295 = vmatprep.mubr.bf16.mxu0 %v828
  %1296 = vmatmul.mubr.bf16.gmra.mxu0 %v397
  %v1297 = vpop.f32.mrf.mxu0
  %v1298 = vadd.f32 %v1165, %v1297
  %v1299 = vpop.f32.mrf.mxu0
  %v1300 = vadd.f32 %v1167, %v1299
  %v1301 = vpop.f32.mrf.mxu0
  %v1302 = vadd.f32 %v1169, %v1301
  %v1303 = vpop.f32.mrf.mxu0
  %v1304 = vadd.f32 %v1171, %v1303
  %1305 = vmatprep.mubr.bf16.mxu0 %v831
  %1306 = vmatmul.mubr.bf16.gmra.mxu0 %v405
  %v1307 = vpop.f32.mrf.mxu0
  %v1308 = vadd.f32 %v1175, %v1307
  %v1309 = vpop.f32.mrf.mxu0
  %v1310 = vadd.f32 %v1177, %v1309
  %v1311 = vpop.f32.mrf.mxu0
  %v1312 = vadd.f32 %v1179, %v1311
  %v1313 = vpop.f32.mrf.mxu0
  %v1314 = vadd.f32 %v1181, %v1313
  %1315 = vmatprep.mubr.bf16.mxu0 %v834
  %1316 = vmatmul.mubr.bf16.gmra.mxu0 %v413
  %v1317 = vpop.f32.mrf.mxu0
  %v1318 = vadd.f32 %v1185, %v1317
  %v1319 = vpop.f32.mrf.mxu0
  %v1320 = vadd.f32 %v1187, %v1319
  %v1321 = vpop.f32.mrf.mxu0
  %v1322 = vadd.f32 %v1189, %v1321
  %v1323 = vpop.f32.mrf.mxu0
  %v1324 = vadd.f32 %v1191, %v1323
  %1325 = vmatprep.mubr.bf16.mxu0 %v837
  %1326 = vmatmul.mubr.bf16.gmra.mxu0 %v421
  %v1327 = vpop.f32.mrf.mxu0
  %v1328 = vadd.f32 %v1195, %v1327
  %v1329 = vpop.f32.mrf.mxu0
  %v1330 = vadd.f32 %v1197, %v1329
  %v1331 = vpop.f32.mrf.mxu0
  %v1332 = vadd.f32 %v1199, %v1331
  %v1333 = vpop.f32.mrf.mxu0
  %v1334 = vadd.f32 %v1201, %v1333
  %1335 = vmatprep.mubr.bf16.mxu0 %v840
  %1336 = vmatmul.mubr.bf16.gmra.mxu0 %v429
  %v1337 = vpop.f32.mrf.mxu0
  %v1338 = vadd.f32 %v1205, %v1337
  %v1339 = vpop.f32.mrf.mxu0
  %v1340 = vadd.f32 %v1207, %v1339
  %v1341 = vpop.f32.mrf.mxu0
  %v1342 = vadd.f32 %v1209, %v1341
  %v1343 = vpop.f32.mrf.mxu0
  %v1344 = vadd.f32 %v1211, %v1343
  %1345 = vmatprep.mubr.bf16.mxu0 %v843
  %1346 = vmatmul.mubr.bf16.gmra.mxu0 %v437
  %v1347 = vpop.f32.mrf.mxu0
  %v1348 = vadd.f32 %v1215, %v1347
  %v1349 = vpop.f32.mrf.mxu0
  %v1350 = vadd.f32 %v1217, %v1349
  %v1351 = vpop.f32.mrf.mxu0
  %v1352 = vadd.f32 %v1219, %v1351
  %v1353 = vpop.f32.mrf.mxu0
  %v1354 = vadd.f32 %v1221, %v1353
  %1355 = vmatprep.mubr.bf16.mxu0 %v846
  %1356 = vmatmul.mubr.bf16.gmra.mxu0 %v445
  %v1357 = vpop.f32.mrf.mxu0
  %v1358 = vadd.f32 %v1225, %v1357
  %v1359 = vpop.f32.mrf.mxu0
  %v1360 = vadd.f32 %v1227, %v1359
  %v1361 = vpop.f32.mrf.mxu0
  %v1362 = vadd.f32 %v1229, %v1361
  %v1363 = vpop.f32.mrf.mxu0
  %v1364 = vadd.f32 %v1231, %v1363
  %1365 = vmatprep.mubr.bf16.mxu0 %v849
  %1366 = vmatmul.mubr.bf16.gmra.mxu0 %v453
  %v1367 = vpop.f32.mrf.mxu0
  %v1368 = vadd.f32 %v1235, %v1367
  %v1369 = vpop.f32.mrf.mxu0
  %v1370 = vadd.f32 %v1237, %v1369
  %v1371 = vpop.f32.mrf.mxu0
  %v1372 = vadd.f32 %v1239, %v1371
  %v1373 = vpop.f32.mrf.mxu0
  %v1374 = vadd.f32 %v1241, %v1373
  %1375 = vmatprep.mubr.bf16.mxu0 %v852
  %1376 = vmatmul.mubr.bf16.gmra.mxu0 %v461
  %v1377 = vpop.f32.mrf.mxu0
  %v1378 = vadd.f32 %v1245, %v1377
  %v1379 = vpop.f32.mrf.mxu0
  %v1380 = vadd.f32 %v1247, %v1379
  %v1381 = vpop.f32.mrf.mxu0
  %v1382 = vadd.f32 %v1249, %v1381
  %v1383 = vpop.f32.mrf.mxu0
  %v1384 = vadd.f32 %v1251, %v1383
  %1385 = vdwg.mxu0
  %1386 = vst [vmem:[%s3] sm:$0xff] %v1288
  %vm1387 = vcmask 556032
  %1388 = vst.msk [vmem:[%s3 + $0x8] sm:$0xff] %vm1387, %v1290
  %1389 = vst [vmem:[%s3 + $0x10] sm:$0xff] %v1292
  %1390 = vst.msk [vmem:[%s3 + $0x18] sm:$0xff] %vm1387, %v1294
  %1391 = vst [vmem:[%s3 + $0x20] sm:$0xff] %v1298
  %1392 = vst.msk [vmem:[%s3 + $0x28] sm:$0xff] %vm1387, %v1300
  %1393 = vst [vmem:[%s3 + $0x30] sm:$0xff] %v1302
  %1394 = vst.msk [vmem:[%s3 + $0x38] sm:$0xff] %vm1387, %v1304
  %1395 = vst [vmem:[%s3 + $0x40] sm:$0xff] %v1308
  %1396 = vst.msk [vmem:[%s3 + $0x48] sm:$0xff] %vm1387, %v1310
  %1397 = vst [vmem:[%s3 + $0x50] sm:$0xff] %v1312
  %1398 = vst.msk [vmem:[%s3 + $0x58] sm:$0xff] %vm1387, %v1314
  %1399 = vst [vmem:[%s3 + $0x60] sm:$0xff] %v1318
  %1400 = vst.msk [vmem:[%s3 + $0x68] sm:$0xff] %vm1387, %v1320
  %1401 = vst [vmem:[%s3 + $0x70] sm:$0xff] %v1322
  %1402 = vst.msk [vmem:[%s3 + $0x78] sm:$0xff] %vm1387, %v1324
  %1403 = vst [vmem:[%s3 + $0x80] sm:$0xff] %v1328
  %1404 = vst.msk [vmem:[%s3 + $0x88] sm:$0xff] %vm1387, %v1330
  %1405 = vst [vmem:[%s3 + $0x90] sm:$0xff] %v1332
  %1406 = vst.msk [vmem:[%s3 + $0x98] sm:$0xff] %vm1387, %v1334
  %1407 = vst [vmem:[%s3 + $0xa0] sm:$0xff] %v1338
  %1408 = vst.msk [vmem:[%s3 + $0xa8] sm:$0xff] %vm1387, %v1340
  %1409 = vst [vmem:[%s3 + $0xb0] sm:$0xff] %v1342
  %1410 = vst.msk [vmem:[%s3 + $0xb8] sm:$0xff] %vm1387, %v1344
  %1411 = vst [vmem:[%s3 + $0xc0] sm:$0xff] %v1348
  %1412 = vst.msk [vmem:[%s3 + $0xc8] sm:$0xff] %vm1387, %v1350
  %1413 = vst [vmem:[%s3 + $0xd0] sm:$0xff] %v1352
  %1414 = vst.msk [vmem:[%s3 + $0xd8] sm:$0xff] %vm1387, %v1354
  %1415 = vst [vmem:[%s3 + $0xe0] sm:$0xff] %v1358
  %1416 = vst.msk [vmem:[%s3 + $0xe8] sm:$0xff] %vm1387, %v1360
  %1417 = vst [vmem:[%s3 + $0xf0] sm:$0xff] %v1362
  %1418 = vst.msk [vmem:[%s3 + $0xf8] sm:$0xff] %vm1387, %v1364
  %1419 = vst [vmem:[%s3 + $0x100] sm:$0xff] %v1368
  %1420 = vst.msk [vmem:[%s3 + $0x108] sm:$0xff] %vm1387, %v1370
  %1421 = vst [vmem:[%s3 + $0x110] sm:$0xff] %v1372
  %1422 = vst.msk [vmem:[%s3 + $0x118] sm:$0xff] %vm1387, %v1374
  %1423 = vst [vmem:[%s3 + $0x120] sm:$0xff] %v1378
  %1424 = vst.msk [vmem:[%s3 + $0x128] sm:$0xff] %vm1387, %v1380
  %1425 = vst [vmem:[%s3 + $0x130] sm:$0xff] %v1382
  %1426 = vst.msk [vmem:[%s3 + $0x138] sm:$0xff] %vm1387, %v1384
  // Predicated region
  $region14: #{se_gate_conv1x1.1} parent=0 // pred_check
    _
  $region15: #{se_gate_conv1x1.1} parent=0 // pred_check_branch
    %1428 = sbr.rel (0) target = $region17
  $region16: #{se_gate_conv1x1.1} parent=0 // pred_region
    _
  $region17: #{se_gate_conv1x1.1} parent=0 // pred_fallthru
    _
  // Predicated region
  $region18: #{se_gate_conv1x1.1} parent=0 // pred_check
    _
  $region19: #{se_gate_conv1x1.1} parent=0 // pred_check_branch
    %1430 = sbr.rel (0) target = $region21
  $region20: #{se_gate_conv1x1.1} parent=0 // pred_region
    _
  $region21: #{se_gate_conv1x1.1} parent=0 // pred_fallthru
    _

</llo_original>
